<compile_context>
chip_gen: v7x
topology: tpu7x:2x2x1
jax: 0.10.0
libtpu: 0.0.40
codegen_flags: <defaults>
</compile_context>

<pallas_src>
import functools
import math

import jax
import jax.numpy as jnp
from jax import lax
from jax.experimental import pallas as pl
from jax.experimental.pallas import tpu as pltpu


# ------------------------------ Pallas kernel --------------------------------

def _dmff_kernel(x_ref, y_ref, w1_ref, b1_ref, wg_ref, bg_ref,
                 mask_l_ref, mask_r_ref, o_ref,
                 cat_ref, pad_ref, win_ref, *, B, C, H, W, S_pad):
    """One grid step: B images, batch folded onto the 128-lane axis."""
    HW = H * W
    PAD = W + 1            # halo big enough for a +-(W+1) flat-pixel shift
    C2 = 2 * C

    # ---- stage [x; y] channel-concat with batch on lanes: (2C, B*HW) -------
    for b in range(B):
        cat_ref[0:C, b * HW:(b + 1) * HW] = x_ref[b]
        cat_ref[C:C2, b * HW:(b + 1) * HW] = y_ref[b]

    # ---- conv1 (1x1, 2C -> 2C) as a single K=2C matmul + LeakyReLU(0.1) ----
    feat = (jnp.dot(w1_ref[...], cat_ref[...],
                    preferred_element_type=jnp.float32) + b1_ref[...])
    feat = jnp.where(feat >= 0.0, feat, 0.1 * feat)            # (2C, B*HW)

    # ---- refresh the zero halo + write this step's feat into the per-image
    # padded flat-pixel buffers.  Only the halo lanes that the shifted reads
    # can touch ([0, PAD) and [PAD+HW, 2*PAD+HW) per image) are re-zeroed; the
    # interior [PAD, PAD+HW) is fully rewritten every step.
    zero_halo = jnp.zeros((C2, PAD), jnp.float32)
    for b in range(B):
        base = b * S_pad
        pad_ref[:, base:base + PAD] = zero_halo
        pad_ref[:, base + PAD + HW:base + 2 * PAD + HW] = zero_halo
        pad_ref[:, base + PAD:base + PAD + HW] = feat[:, b * HW:(b + 1) * HW]

    mask_l = mask_l_ref[...]     # (1, HW): 0 where w == 0      (for dw = -1)
    mask_r = mask_r_ref[...]     # (1, HW): 0 where w == W - 1  (for dw = +1)

    # ---- stage the 9 shifted, edge-masked taps of feat (both branches at
    # once): tap k = kh*3+kw occupies sublane rows [k*2C, (k+1)*2C).
    for b in range(B):
        base = b * S_pad + PAD
        for kh in range(3):
            for kw in range(3):
                k = kh * 3 + kw
                start = base + (kh - 1) * W + (kw - 1)          # static offset
                win = pad_ref[:, start:start + HW]              # (2C, HW)
                if kw == 0:
                    win = win * mask_l
                elif kw == 2:
                    win = win * mask_r
                win_ref[k * C2:(k + 1) * C2, b * HW:(b + 1) * HW] = win

    # ---- both gated 3x3 convs in ONE deep-K matmul: (2C,18C) @ (18C, B*HW) -
    pre = (jnp.dot(wg_ref[...], win_ref[...],
                   preferred_element_type=jnp.float32) + bg_ref[...])
    gate = jax.nn.sigmoid(pre)                                  # (2C, B*HW)
    out = feat[0:C] * gate[0:C] + feat[C:C2] * gate[C:C2]       # (C, B*HW)

    for b in range(B):
        o_ref[b] = out[:, b * HW:(b + 1) * HW].astype(o_ref.dtype)


# ------------------------------ wrapper ---------------------------------------

def _pick_batch_block(N, HW, max_lanes):
    """Largest divisor B of N with B*HW <= max_lanes, preferring >= 2 steps."""
    divs = [b for b in range(1, N + 1) if N % b == 0 and b * HW <= max_lanes]
    if not divs:
        return 1
    pref = [b for b in divs if N // b >= 2]      # keep both v7x TCs busy
    return max(pref) if pref else max(divs)


def dmff_forward(params, x, y, *, max_lanes=2048):
    """DMFF forward.  x, y: (N, C, H, W) float32, PyTorch NCHW layout."""
    N, C, H, W = x.shape
    HW = H * W
    B = _pick_batch_block(N, HW, max_lanes)      # images per grid step

    xf = x.reshape(N, C, HW).astype(jnp.float32)
    yf = y.reshape(N, C, HW).astype(jnp.float32)

    # conv1 weight (2C, 2C, 1, 1) -> (2C, 2C); biases as column vectors
    w1 = params["w1"][:, :, 0, 0].astype(jnp.float32)
    b1 = params["b1"].reshape(2 * C, 1).astype(jnp.float32)

    # Fused block-diagonal gated-conv weight (2C, 18C): for tap k = kh*3+kw,
    # columns [k*2C, k*2C+C) hit branch-1 (w2 / f1) input channels and columns
    # [k*2C+C, (k+1)*2C) hit branch-2 (w3 / f2) input channels.
    w2t = jnp.transpose(params["w2"], (2, 3, 0, 1)).reshape(9, C, C)
    w3t = jnp.transpose(params["w3"], (2, 3, 0, 1)).reshape(9, C, C)
    z = jnp.zeros_like(w2t)
    wg_top = jnp.transpose(jnp.concatenate([w2t, z], axis=2),
                           (1, 0, 2)).reshape(C, 18 * C)
    wg_bot = jnp.transpose(jnp.concatenate([z, w3t], axis=2),
                           (1, 0, 2)).reshape(C, 18 * C)
    wg = jnp.concatenate([wg_top, wg_bot], axis=0).astype(jnp.float32)
    bg = jnp.concatenate([params["b2"], params["b3"]]
                         ).reshape(2 * C, 1).astype(jnp.float32)

    # horizontal-validity masks for the +-1 lane shifts of the flat layout
    col = jnp.arange(HW, dtype=jnp.int32) % W
    mask_l = (col > 0).astype(jnp.float32).reshape(1, HW)
    mask_r = (col < W - 1).astype(jnp.float32).reshape(1, HW)

    PAD = W + 1
    S_pad = pl.cdiv(HW + 2 * PAD, 128) * 128   # lane-tile-aligned per-image slot

    full = lambda i: (0, 0)
    batched = lambda i: (i, 0, 0)

    out = pl.pallas_call(
        functools.partial(_dmff_kernel, B=B, C=C, H=H, W=W, S_pad=S_pad),
        out_shape=jax.ShapeDtypeStruct((N, C, HW), jnp.float32),
        grid_spec=pltpu.PrefetchScalarGridSpec(
            num_scalar_prefetch=0,
            grid=(N // B,),
            in_specs=[
                pl.BlockSpec((B, C, HW), batched),        # x block
                pl.BlockSpec((B, C, HW), batched),        # y block
                pl.BlockSpec((2 * C, 2 * C), full),       # w1 (1x1 conv)
                pl.BlockSpec((2 * C, 1), full),           # b1
                pl.BlockSpec((2 * C, 18 * C), full),      # fused 3x3 weights
                pl.BlockSpec((2 * C, 1), full),           # fused 3x3 biases
                pl.BlockSpec((1, HW), full),              # mask_l
                pl.BlockSpec((1, HW), full),              # mask_r
            ],
            out_specs=pl.BlockSpec((B, C, HW), batched),
            scratch_shapes=[
                pltpu.VMEM((2 * C, B * HW), jnp.float32),      # [x;y] staging
                pltpu.VMEM((2 * C, B * S_pad), jnp.float32),   # padded feat
                pltpu.VMEM((18 * C, B * HW), jnp.float32),     # 9-tap windows
            ],
        ),
        compiler_params=pltpu.CompilerParams(
            dimension_semantics=("parallel",)),
    )(xf, yf, w1, b1, wg, bg, mask_l, mask_r)

    return out.reshape(N, C, H, W)


# ------------------------------ pure-JAX reference ----------------------------

def dmff_reference(params, x, y):
    C = x.shape[1]
    dn = ("NCHW", "OIHW", "NCHW")
    hi = lax.Precision.HIGHEST
    feat = jnp.concatenate([x, y], axis=1)
    feat = lax.conv_general_dilated(feat, params["w1"], (1, 1), "VALID",
                                    dimension_numbers=dn, precision=hi)
    feat = feat + params["b1"][None, :, None, None]
    feat = jnp.where(feat >= 0.0, feat, 0.1 * feat)
    f1, f2 = feat[:, :C], feat[:, C:]
    c2 = lax.conv_general_dilated(f1, params["w2"], (1, 1), ((1, 1), (1, 1)),
                                  dimension_numbers=dn, precision=hi)
    c2 = c2 + params["b2"][None, :, None, None]
    c3 = lax.conv_general_dilated(f2, params["w3"], (1, 1), ((1, 1), (1, 1)),
                                  dimension_numbers=dn, precision=hi)
    c3 = c3 + params["b3"][None, :, None, None]
    return f1 * jax.nn.sigmoid(c2) + f2 * jax.nn.sigmoid(c3)


# ------------------------------ main -------------------------------------------

if __name__ == "__main__":
    N_FEAT = 8            # DMFF(n_feat=8)
    BATCH, H, W = 4, 16, 16
    C = N_FEAT

    key = jax.random.PRNGKey(0)
    k = jax.random.split(key, 8)

    # PyTorch-layout parameters (Cout, Cin, KH, KW)
    params = dict(
        w1=jax.random.normal(k[0], (2 * C, 2 * C, 1, 1), jnp.float32)
           / math.sqrt(2 * C),
        b1=0.01 * jax.random.normal(k[1], (2 * C,), jnp.float32),
        w2=jax.random.normal(k[2], (C, C, 3, 3), jnp.float32)
           / math.sqrt(9 * C),
        b2=0.01 * jax.random.normal(k[3], (C,), jnp.float32),
        w3=jax.random.normal(k[4], (C, C, 3, 3), jnp.float32)
           / math.sqrt(9 * C),
        b3=0.01 * jax.random.normal(k[5], (C,), jnp.float32),
    )
    x = jax.random.normal(k[6], (BATCH, C, H, W), jnp.float32)
    y = jax.random.normal(k[7], (BATCH, C, H, W), jnp.float32)

    fwd = jax.jit(dmff_forward)
    out = fwd(params, x, y)
    jax.block_until_ready(out)
    assert out.shape == (BATCH, C, H, W)

    ref = dmff_reference(params, x, y)
    err = float(jnp.max(jnp.abs(out - ref)))
    assert err < 1e-4, f"Pallas DMFF mismatch vs reference: max abs err {err}"

    print("KERNEL_OK")
</pallas_src>

<mosaic_0001>
module attributes {stable_mosaic.version = 11 : i64} {
  func.func @_dmff_kernel(%arg0: i32, %arg1: memref<2x8x256xf32, #tpu.memory_space<vmem>>, %arg2: memref<2x8x256xf32, #tpu.memory_space<vmem>>, %arg3: memref<16x16xf32, #tpu.memory_space<vmem>>, %arg4: memref<16x1xf32, #tpu.memory_space<vmem>>, %arg5: memref<16x144xf32, #tpu.memory_space<vmem>>, %arg6: memref<16x1xf32, #tpu.memory_space<vmem>>, %arg7: memref<1x256xf32, #tpu.memory_space<vmem>>, %arg8: memref<1x256xf32, #tpu.memory_space<vmem>>, %arg9: memref<2x8x256xf32, #tpu.memory_space<vmem>>, %arg10: memref<16x512xf32, #tpu.memory_space<vmem>>, %arg11: memref<16x768xf32, #tpu.memory_space<vmem>>, %arg12: memref<144x512xf32, #tpu.memory_space<vmem>>) attributes {dimension_semantics = [#tpu.dimension_semantics<parallel>], iteration_bounds = array<i64: 2>, scalar_prefetch = 0 : i64, scratch_operands = 3 : i64, tpu.core_type = #tpu.core_type<tc>, window_params = [{transform_indices = @transform_0, window_bounds = array<i64: 2, 8, 256>}, {transform_indices = @transform_1, window_bounds = array<i64: 2, 8, 256>}, {pipeline_mode = #tpu.pipeline_mode<synchronous>, transform_indices = @transform_2, window_bounds = array<i64: 16, 16>}, {pipeline_mode = #tpu.pipeline_mode<synchronous>, transform_indices = @transform_3, window_bounds = array<i64: 16, 1>}, {pipeline_mode = #tpu.pipeline_mode<synchronous>, transform_indices = @transform_4, window_bounds = array<i64: 16, 144>}, {pipeline_mode = #tpu.pipeline_mode<synchronous>, transform_indices = @transform_5, window_bounds = array<i64: 16, 1>}, {pipeline_mode = #tpu.pipeline_mode<synchronous>, transform_indices = @transform_6, window_bounds = array<i64: 1, 256>}, {pipeline_mode = #tpu.pipeline_mode<synchronous>, transform_indices = @transform_7, window_bounds = array<i64: 1, 256>}, {transform_indices = @transform_8, window_bounds = array<i64: 2, 8, 256>}]} {
    %c0 = arith.constant 0 : index
    %c0_0 = arith.constant 0 : index
    %c0_1 = arith.constant 0 : index
    %0 = vector.load %arg1[%c0, %c0_0, %c0_1] : memref<2x8x256xf32, #tpu.memory_space<vmem>>, vector<1x8x256xf32>
    %1 = vector.shape_cast %0 : vector<1x8x256xf32> to vector<8x256xf32>
    %c0_2 = arith.constant 0 : index
    %c0_3 = arith.constant 0 : index
    %2 = vector.load %arg10[%c0_2, %c0_3] : memref<16x512xf32, #tpu.memory_space<vmem>>, vector<8x256xf32>
    tpu.vector_store %arg10[%c0_2, %c0_3], %1 {strides = array<i32>} : memref<16x512xf32, #tpu.memory_space<vmem>>, vector<8x256xf32>,
    %c0_4 = arith.constant 0 : index
    %c0_5 = arith.constant 0 : index
    %c0_6 = arith.constant 0 : index
    %3 = vector.load %arg2[%c0_4, %c0_5, %c0_6] : memref<2x8x256xf32, #tpu.memory_space<vmem>>, vector<1x8x256xf32>
    %4 = vector.shape_cast %3 : vector<1x8x256xf32> to vector<8x256xf32>
    %c8 = arith.constant 8 : index
    %c0_7 = arith.constant 0 : index
    %5 = vector.load %arg10[%c8, %c0_7] : memref<16x512xf32, #tpu.memory_space<vmem>>, vector<8x256xf32>
    tpu.vector_store %arg10[%c8, %c0_7], %4 {strides = array<i32>} : memref<16x512xf32, #tpu.memory_space<vmem>>, vector<8x256xf32>,
    %c1 = arith.constant 1 : index
    %c0_8 = arith.constant 0 : index
    %c0_9 = arith.constant 0 : index
    %6 = vector.load %arg1[%c1, %c0_8, %c0_9] : memref<2x8x256xf32, #tpu.memory_space<vmem>>, vector<1x8x256xf32>
    %7 = vector.shape_cast %6 : vector<1x8x256xf32> to vector<8x256xf32>
    %c0_10 = arith.constant 0 : index
    %c256 = arith.constant 256 : index
    %8 = vector.load %arg10[%c0_10, %c256] : memref<16x512xf32, #tpu.memory_space<vmem>>, vector<8x256xf32>
    tpu.vector_store %arg10[%c0_10, %c256], %7 {strides = array<i32>} : memref<16x512xf32, #tpu.memory_space<vmem>>, vector<8x256xf32>,
    %c1_11 = arith.constant 1 : index
    %c0_12 = arith.constant 0 : index
    %c0_13 = arith.constant 0 : index
    %9 = vector.load %arg2[%c1_11, %c0_12, %c0_13] : memref<2x8x256xf32, #tpu.memory_space<vmem>>, vector<1x8x256xf32>
    %10 = vector.shape_cast %9 : vector<1x8x256xf32> to vector<8x256xf32>
    %c8_14 = arith.constant 8 : index
    %c256_15 = arith.constant 256 : index
    %11 = vector.load %arg10[%c8_14, %c256_15] : memref<16x512xf32, #tpu.memory_space<vmem>>, vector<8x256xf32>
    tpu.vector_store %arg10[%c8_14, %c256_15], %10 {strides = array<i32>} : memref<16x512xf32, #tpu.memory_space<vmem>>, vector<8x256xf32>,
    %c0_16 = arith.constant 0 : index
    %c0_17 = arith.constant 0 : index
    %12 = vector.load %arg3[%c0_16, %c0_17] : memref<16x16xf32, #tpu.memory_space<vmem>>, vector<16x16xf32>
    %c0_18 = arith.constant 0 : index
    %c0_19 = arith.constant 0 : index
    %13 = vector.load %arg10[%c0_18, %c0_19] : memref<16x512xf32, #tpu.memory_space<vmem>>, vector<16x512xf32>
    %cst = arith.constant dense<0.000000e+00> : vector<16x512xf32>
    %14 = tpu.matmul %12, %13, %cst {dimension_numbers = #tpu.dot_dimension_numbers<[1], [0], [0], [1], [0, 0, 1, 1], [], []>} : vector<16x16xf32>, vector<16x512xf32>, vector<16x512xf32> -> vector<16x512xf32>
    %c0_20 = arith.constant 0 : index
    %c0_21 = arith.constant 0 : index
    %15 = vector.load %arg4[%c0_20, %c0_21] : memref<16x1xf32, #tpu.memory_space<vmem>>, vector<16x1xf32>
    %16 = vector.broadcast %15 : vector<16x1xf32> to vector<16x512xf32>
    %17 = arith.addf %14, %16 : vector<16x512xf32>
    %cst_22 = arith.constant 0.000000e+00 : f32
    %18 = vector.broadcast %cst_22 : f32 to vector<16x512xf32>
    %19 = arith.cmpf oge, %17, %18 : vector<16x512xf32>
    %cst_23 = arith.constant 1.000000e-01 : f32
    %20 = vector.broadcast %cst_23 : f32 to vector<16x512xf32>
    %21 = arith.mulf %20, %17 : vector<16x512xf32>
    %22 = arith.select %19, %17, %21 : vector<16x512xi1>, vector<16x512xf32>
    %cst_24 = arith.constant 0.000000e+00 : f32
    %23 = vector.broadcast %cst_24 : f32 to vector<16x17xf32>
    %c0_25 = arith.constant 0 : index
    %c0_26 = arith.constant 0 : index
    %24 = vector.load %arg11[%c0_25, %c0_26] : memref<16x768xf32, #tpu.memory_space<vmem>>, vector<16x17xf32>
    tpu.vector_store %arg11[%c0_25, %c0_26], %23 {strides = array<i32>} : memref<16x768xf32, #tpu.memory_space<vmem>>, vector<16x17xf32>,
    %c0_27 = arith.constant 0 : index
    %c273 = arith.constant 273 : index
    %25 = vector.load %arg11[%c0_27, %c273] : memref<16x768xf32, #tpu.memory_space<vmem>>, vector<16x17xf32>
    tpu.vector_store %arg11[%c0_27, %c273], %23 {strides = array<i32>} : memref<16x768xf32, #tpu.memory_space<vmem>>, vector<16x17xf32>,
    %26 = vector.extract_strided_slice %22 {offsets = [0, 0], sizes = [16, 256], strides = [1, 1]} : vector<16x512xf32> to vector<16x256xf32>
    %c0_28 = arith.constant 0 : index
    %c17 = arith.constant 17 : index
    %27 = vector.load %arg11[%c0_28, %c17] : memref<16x768xf32, #tpu.memory_space<vmem>>, vector<16x256xf32>
    tpu.vector_store %arg11[%c0_28, %c17], %26 {strides = array<i32>} : memref<16x768xf32, #tpu.memory_space<vmem>>, vector<16x256xf32>,
    %c0_29 = arith.constant 0 : index
    %c384 = arith.constant 384 : index
    %28 = vector.load %arg11[%c0_29, %c384] : memref<16x768xf32, #tpu.memory_space<vmem>>, vector<16x17xf32>
    tpu.vector_store %arg11[%c0_29, %c384], %23 {strides = array<i32>} : memref<16x768xf32, #tpu.memory_space<vmem>>, vector<16x17xf32>,
    %c0_30 = arith.constant 0 : index
    %c657 = arith.constant 657 : index
    %29 = vector.load %arg11[%c0_30, %c657] : memref<16x768xf32, #tpu.memory_space<vmem>>, vector<16x17xf32>
    tpu.vector_store %arg11[%c0_30, %c657], %23 {strides = array<i32>} : memref<16x768xf32, #tpu.memory_space<vmem>>, vector<16x17xf32>,
    %30 = vector.extract_strided_slice %22 {offsets = [0, 256], sizes = [16, 256], strides = [1, 1]} : vector<16x512xf32> to vector<16x256xf32>
    %c0_31 = arith.constant 0 : index
    %c401 = arith.constant 401 : index
    %31 = vector.load %arg11[%c0_31, %c401] : memref<16x768xf32, #tpu.memory_space<vmem>>, vector<16x256xf32>
    tpu.vector_store %arg11[%c0_31, %c401], %30 {strides = array<i32>} : memref<16x768xf32, #tpu.memory_space<vmem>>, vector<16x256xf32>,
    %c0_32 = arith.constant 0 : index
    %c0_33 = arith.constant 0 : index
    %32 = vector.load %arg7[%c0_32, %c0_33] : memref<1x256xf32, #tpu.memory_space<vmem>>, vector<1x256xf32>
    %c0_34 = arith.constant 0 : index
    %c0_35 = arith.constant 0 : index
    %33 = vector.load %arg8[%c0_34, %c0_35] : memref<1x256xf32, #tpu.memory_space<vmem>>, vector<1x256xf32>
    %c0_36 = arith.constant 0 : index
    %c0_37 = arith.constant 0 : index
    %34 = vector.load %arg11[%c0_36, %c0_37] : memref<16x768xf32, #tpu.memory_space<vmem>>, vector<16x256xf32>
    %35 = vector.broadcast %32 : vector<1x256xf32> to vector<16x256xf32>
    %36 = arith.mulf %34, %35 : vector<16x256xf32>
    %c0_38 = arith.constant 0 : index
    %c0_39 = arith.constant 0 : index
    %37 = vector.load %arg12[%c0_38, %c0_39] : memref<144x512xf32, #tpu.memory_space<vmem>>, vector<16x256xf32>
    tpu.vector_store %arg12[%c0_38, %c0_39], %36 {strides = array<i32>} : memref<144x512xf32, #tpu.memory_space<vmem>>, vector<16x256xf32>,
    %c0_40 = arith.constant 0 : index
    %c1_41 = arith.constant 1 : index
    %38 = vector.load %arg11[%c0_40, %c1_41] : memref<16x768xf32, #tpu.memory_space<vmem>>, vector<16x256xf32>
    %c16 = arith.constant 16 : index
    %c0_42 = arith.constant 0 : index
    %39 = vector.load %arg12[%c16, %c0_42] : memref<144x512xf32, #tpu.memory_space<vmem>>, vector<16x256xf32>
    tpu.vector_store %arg12[%c16, %c0_42], %38 {strides = array<i32>} : memref<144x512xf32, #tpu.memory_space<vmem>>, vector<16x256xf32>,
    %c0_43 = arith.constant 0 : index
    %c2 = arith.constant 2 : index
    %40 = vector.load %arg11[%c0_43, %c2] : memref<16x768xf32, #tpu.memory_space<vmem>>, vector<16x256xf32>
    %41 = vector.broadcast %33 : vector<1x256xf32> to vector<16x256xf32>
    %42 = arith.mulf %40, %41 : vector<16x256xf32>
    %c32 = arith.constant 32 : index
    %c0_44 = arith.constant 0 : index
    %43 = vector.load %arg12[%c32, %c0_44] : memref<144x512xf32, #tpu.memory_space<vmem>>, vector<16x256xf32>
    tpu.vector_store %arg12[%c32, %c0_44], %42 {strides = array<i32>} : memref<144x512xf32, #tpu.memory_space<vmem>>, vector<16x256xf32>,
    %c0_45 = arith.constant 0 : index
    %c16_46 = arith.constant 16 : index
    %44 = vector.load %arg11[%c0_45, %c16_46] : memref<16x768xf32, #tpu.memory_space<vmem>>, vector<16x256xf32>
    %45 = vector.broadcast %32 : vector<1x256xf32> to vector<16x256xf32>
    %46 = arith.mulf %44, %45 : vector<16x256xf32>
    %c48 = arith.constant 48 : index
    %c0_47 = arith.constant 0 : index
    %47 = vector.load %arg12[%c48, %c0_47] : memref<144x512xf32, #tpu.memory_space<vmem>>, vector<16x256xf32>
    tpu.vector_store %arg12[%c48, %c0_47], %46 {strides = array<i32>} : memref<144x512xf32, #tpu.memory_space<vmem>>, vector<16x256xf32>,
    %c0_48 = arith.constant 0 : index
    %c17_49 = arith.constant 17 : index
    %48 = vector.load %arg11[%c0_48, %c17_49] : memref<16x768xf32, #tpu.memory_space<vmem>>, vector<16x256xf32>
    %c64 = arith.constant 64 : index
    %c0_50 = arith.constant 0 : index
    %49 = vector.load %arg12[%c64, %c0_50] : memref<144x512xf32, #tpu.memory_space<vmem>>, vector<16x256xf32>
    tpu.vector_store %arg12[%c64, %c0_50], %48 {strides = array<i32>} : memref<144x512xf32, #tpu.memory_space<vmem>>, vector<16x256xf32>,
    %c0_51 = arith.constant 0 : index
    %c18 = arith.constant 18 : index
    %50 = vector.load %arg11[%c0_51, %c18] : memref<16x768xf32, #tpu.memory_space<vmem>>, vector<16x256xf32>
    %51 = vector.broadcast %33 : vector<1x256xf32> to vector<16x256xf32>
    %52 = arith.mulf %50, %51 : vector<16x256xf32>
    %c80 = arith.constant 80 : index
    %c0_52 = arith.constant 0 : index
    %53 = vector.load %arg12[%c80, %c0_52] : memref<144x512xf32, #tpu.memory_space<vmem>>, vector<16x256xf32>
    tpu.vector_store %arg12[%c80, %c0_52], %52 {strides = array<i32>} : memref<144x512xf32, #tpu.memory_space<vmem>>, vector<16x256xf32>,
    %c0_53 = arith.constant 0 : index
    %c32_54 = arith.constant 32 : index
    %54 = vector.load %arg11[%c0_53, %c32_54] : memref<16x768xf32, #tpu.memory_space<vmem>>, vector<16x256xf32>
    %55 = vector.broadcast %32 : vector<1x256xf32> to vector<16x256xf32>
    %56 = arith.mulf %54, %55 : vector<16x256xf32>
    %c96 = arith.constant 96 : index
    %c0_55 = arith.constant 0 : index
    %57 = vector.load %arg12[%c96, %c0_55] : memref<144x512xf32, #tpu.memory_space<vmem>>, vector<16x256xf32>
    tpu.vector_store %arg12[%c96, %c0_55], %56 {strides = array<i32>} : memref<144x512xf32, #tpu.memory_space<vmem>>, vector<16x256xf32>,
    %c0_56 = arith.constant 0 : index
    %c33 = arith.constant 33 : index
    %58 = vector.load %arg11[%c0_56, %c33] : memref<16x768xf32, #tpu.memory_space<vmem>>, vector<16x256xf32>
    %c112 = arith.constant 112 : index
    %c0_57 = arith.constant 0 : index
    %59 = vector.load %arg12[%c112, %c0_57] : memref<144x512xf32, #tpu.memory_space<vmem>>, vector<16x256xf32>
    tpu.vector_store %arg12[%c112, %c0_57], %58 {strides = array<i32>} : memref<144x512xf32, #tpu.memory_space<vmem>>, vector<16x256xf32>,
    %c0_58 = arith.constant 0 : index
    %c34 = arith.constant 34 : index
    %60 = vector.load %arg11[%c0_58, %c34] : memref<16x768xf32, #tpu.memory_space<vmem>>, vector<16x256xf32>
    %61 = vector.broadcast %33 : vector<1x256xf32> to vector<16x256xf32>
    %62 = arith.mulf %60, %61 : vector<16x256xf32>
    %c128 = arith.constant 128 : index
    %c0_59 = arith.constant 0 : index
    %63 = vector.load %arg12[%c128, %c0_59] : memref<144x512xf32, #tpu.memory_space<vmem>>, vector<16x256xf32>
    tpu.vector_store %arg12[%c128, %c0_59], %62 {strides = array<i32>} : memref<144x512xf32, #tpu.memory_space<vmem>>, vector<16x256xf32>,
    %c0_60 = arith.constant 0 : index
    %c384_61 = arith.constant 384 : index
    %64 = vector.load %arg11[%c0_60, %c384_61] : memref<16x768xf32, #tpu.memory_space<vmem>>, vector<16x256xf32>
    %65 = vector.broadcast %32 : vector<1x256xf32> to vector<16x256xf32>
    %66 = arith.mulf %64, %65 : vector<16x256xf32>
    %c0_62 = arith.constant 0 : index
    %c256_63 = arith.constant 256 : index
    %67 = vector.load %arg12[%c0_62, %c256_63] : memref<144x512xf32, #tpu.memory_space<vmem>>, vector<16x256xf32>
    tpu.vector_store %arg12[%c0_62, %c256_63], %66 {strides = array<i32>} : memref<144x512xf32, #tpu.memory_space<vmem>>, vector<16x256xf32>,
    %c0_64 = arith.constant 0 : index
    %c385 = arith.constant 385 : index
    %68 = vector.load %arg11[%c0_64, %c385] : memref<16x768xf32, #tpu.memory_space<vmem>>, vector<16x256xf32>
    %c16_65 = arith.constant 16 : index
    %c256_66 = arith.constant 256 : index
    %69 = vector.load %arg12[%c16_65, %c256_66] : memref<144x512xf32, #tpu.memory_space<vmem>>, vector<16x256xf32>
    tpu.vector_store %arg12[%c16_65, %c256_66], %68 {strides = array<i32>} : memref<144x512xf32, #tpu.memory_space<vmem>>, vector<16x256xf32>,
    %c0_67 = arith.constant 0 : index
    %c386 = arith.constant 386 : index
    %70 = vector.load %arg11[%c0_67, %c386] : memref<16x768xf32, #tpu.memory_space<vmem>>, vector<16x256xf32>
    %71 = vector.broadcast %33 : vector<1x256xf32> to vector<16x256xf32>
    %72 = arith.mulf %70, %71 : vector<16x256xf32>
    %c32_68 = arith.constant 32 : index
    %c256_69 = arith.constant 256 : index
    %73 = vector.load %arg12[%c32_68, %c256_69] : memref<144x512xf32, #tpu.memory_space<vmem>>, vector<16x256xf32>
    tpu.vector_store %arg12[%c32_68, %c256_69], %72 {strides = array<i32>} : memref<144x512xf32, #tpu.memory_space<vmem>>, vector<16x256xf32>,
    %c0_70 = arith.constant 0 : index
    %c400 = arith.constant 400 : index
    %74 = vector.load %arg11[%c0_70, %c400] : memref<16x768xf32, #tpu.memory_space<vmem>>, vector<16x256xf32>
    %75 = vector.broadcast %32 : vector<1x256xf32> to vector<16x256xf32>
    %76 = arith.mulf %74, %75 : vector<16x256xf32>
    %c48_71 = arith.constant 48 : index
    %c256_72 = arith.constant 256 : index
    %77 = vector.load %arg12[%c48_71, %c256_72] : memref<144x512xf32, #tpu.memory_space<vmem>>, vector<16x256xf32>
    tpu.vector_store %arg12[%c48_71, %c256_72], %76 {strides = array<i32>} : memref<144x512xf32, #tpu.memory_space<vmem>>, vector<16x256xf32>,
    %c0_73 = arith.constant 0 : index
    %c401_74 = arith.constant 401 : index
    %78 = vector.load %arg11[%c0_73, %c401_74] : memref<16x768xf32, #tpu.memory_space<vmem>>, vector<16x256xf32>
    %c64_75 = arith.constant 64 : index
    %c256_76 = arith.constant 256 : index
    %79 = vector.load %arg12[%c64_75, %c256_76] : memref<144x512xf32, #tpu.memory_space<vmem>>, vector<16x256xf32>
    tpu.vector_store %arg12[%c64_75, %c256_76], %78 {strides = array<i32>} : memref<144x512xf32, #tpu.memory_space<vmem>>, vector<16x256xf32>,
    %c0_77 = arith.constant 0 : index
    %c402 = arith.constant 402 : index
    %80 = vector.load %arg11[%c0_77, %c402] : memref<16x768xf32, #tpu.memory_space<vmem>>, vector<16x256xf32>
    %81 = vector.broadcast %33 : vector<1x256xf32> to vector<16x256xf32>
    %82 = arith.mulf %80, %81 : vector<16x256xf32>
    %c80_78 = arith.constant 80 : index
    %c256_79 = arith.constant 256 : index
    %83 = vector.load %arg12[%c80_78, %c256_79] : memref<144x512xf32, #tpu.memory_space<vmem>>, vector<16x256xf32>
    tpu.vector_store %arg12[%c80_78, %c256_79], %82 {strides = array<i32>} : memref<144x512xf32, #tpu.memory_space<vmem>>, vector<16x256xf32>,
    %c0_80 = arith.constant 0 : index
    %c416 = arith.constant 416 : index
    %84 = vector.load %arg11[%c0_80, %c416] : memref<16x768xf32, #tpu.memory_space<vmem>>, vector<16x256xf32>
    %85 = vector.broadcast %32 : vector<1x256xf32> to vector<16x256xf32>
    %86 = arith.mulf %84, %85 : vector<16x256xf32>
    %c96_81 = arith.constant 96 : index
    %c256_82 = arith.constant 256 : index
    %87 = vector.load %arg12[%c96_81, %c256_82] : memref<144x512xf32, #tpu.memory_space<vmem>>, vector<16x256xf32>
    tpu.vector_store %arg12[%c96_81, %c256_82], %86 {strides = array<i32>} : memref<144x512xf32, #tpu.memory_space<vmem>>, vector<16x256xf32>,
    %c0_83 = arith.constant 0 : index
    %c417 = arith.constant 417 : index
    %88 = vector.load %arg11[%c0_83, %c417] : memref<16x768xf32, #tpu.memory_space<vmem>>, vector<16x256xf32>
    %c112_84 = arith.constant 112 : index
    %c256_85 = arith.constant 256 : index
    %89 = vector.load %arg12[%c112_84, %c256_85] : memref<144x512xf32, #tpu.memory_space<vmem>>, vector<16x256xf32>
    tpu.vector_store %arg12[%c112_84, %c256_85], %88 {strides = array<i32>} : memref<144x512xf32, #tpu.memory_space<vmem>>, vector<16x256xf32>,
    %c0_86 = arith.constant 0 : index
    %c418 = arith.constant 418 : index
    %90 = vector.load %arg11[%c0_86, %c418] : memref<16x768xf32, #tpu.memory_space<vmem>>, vector<16x256xf32>
    %91 = vector.broadcast %33 : vector<1x256xf32> to vector<16x256xf32>
    %92 = arith.mulf %90, %91 : vector<16x256xf32>
    %c128_87 = arith.constant 128 : index
    %c256_88 = arith.constant 256 : index
    %93 = vector.load %arg12[%c128_87, %c256_88] : memref<144x512xf32, #tpu.memory_space<vmem>>, vector<16x256xf32>
    tpu.vector_store %arg12[%c128_87, %c256_88], %92 {strides = array<i32>} : memref<144x512xf32, #tpu.memory_space<vmem>>, vector<16x256xf32>,
    %c0_89 = arith.constant 0 : index
    %c0_90 = arith.constant 0 : index
    %94 = vector.load %arg5[%c0_89, %c0_90] : memref<16x144xf32, #tpu.memory_space<vmem>>, vector<16x144xf32>
    %c0_91 = arith.constant 0 : index
    %c0_92 = arith.constant 0 : index
    %95 = vector.load %arg12[%c0_91, %c0_92] : memref<144x512xf32, #tpu.memory_space<vmem>>, vector<144x512xf32>
    %cst_93 = arith.constant dense<0.000000e+00> : vector<16x512xf32>
    %96 = tpu.matmul %94, %95, %cst_93 {dimension_numbers = #tpu.dot_dimension_numbers<[1], [0], [0], [1], [0, 0, 1, 1], [], []>} : vector<16x144xf32>, vector<144x512xf32>, vector<16x512xf32> -> vector<16x512xf32>
    %c0_94 = arith.constant 0 : index
    %c0_95 = arith.constant 0 : index
    %97 = vector.load %arg6[%c0_94, %c0_95] : memref<16x1xf32, #tpu.memory_space<vmem>>, vector<16x1xf32>
    %98 = vector.broadcast %97 : vector<16x1xf32> to vector<16x512xf32>
    %99 = arith.addf %96, %98 : vector<16x512xf32>
    %100 = arith.negf %99 : vector<16x512xf32>
    %101 = math.exp %100 : vector<16x512xf32>
    %cst_96 = arith.constant 1.000000e+00 : f32
    %102 = vector.broadcast %cst_96 : f32 to vector<16x512xf32>
    %103 = arith.addf %102, %101 : vector<16x512xf32>
    %104 = arith.divf %102, %103 : vector<16x512xf32>
    %105 = vector.extract_strided_slice %22 {offsets = [0, 0], sizes = [8, 512], strides = [1, 1]} : vector<16x512xf32> to vector<8x512xf32>
    %106 = vector.extract_strided_slice %104 {offsets = [0, 0], sizes = [8, 512], strides = [1, 1]} : vector<16x512xf32> to vector<8x512xf32>
    %107 = arith.mulf %105, %106 : vector<8x512xf32>
    %108 = vector.extract_strided_slice %22 {offsets = [8, 0], sizes = [8, 512], strides = [1, 1]} : vector<16x512xf32> to vector<8x512xf32>
    %109 = vector.extract_strided_slice %104 {offsets = [8, 0], sizes = [8, 512], strides = [1, 1]} : vector<16x512xf32> to vector<8x512xf32>
    %110 = arith.mulf %108, %109 : vector<8x512xf32>
    %111 = arith.addf %107, %110 : vector<8x512xf32>
    %112 = vector.extract_strided_slice %111 {offsets = [0, 0], sizes = [8, 256], strides = [1, 1]} : vector<8x512xf32> to vector<8x256xf32>
    %c0_97 = arith.constant 0 : index
    %c0_98 = arith.constant 0 : index
    %c0_99 = arith.constant 0 : index
    %113 = vector.load %arg9[%c0_97, %c0_98, %c0_99] : memref<2x8x256xf32, #tpu.memory_space<vmem>>, vector<1x8x256xf32>
    %114 = vector.shape_cast %113 : vector<1x8x256xf32> to vector<8x256xf32>
    %115 = vector.shape_cast %112 : vector<8x256xf32> to vector<1x8x256xf32>
    tpu.vector_store %arg9[%c0_97, %c0_98, %c0_99], %115 {strides = array<i32>} : memref<2x8x256xf32, #tpu.memory_space<vmem>>, vector<1x8x256xf32>,
    %116 = vector.extract_strided_slice %111 {offsets = [0, 256], sizes = [8, 256], strides = [1, 1]} : vector<8x512xf32> to vector<8x256xf32>
    %c1_100 = arith.constant 1 : index
    %c0_101 = arith.constant 0 : index
    %c0_102 = arith.constant 0 : index
    %117 = vector.load %arg9[%c1_100, %c0_101, %c0_102] : memref<2x8x256xf32, #tpu.memory_space<vmem>>, vector<1x8x256xf32>
    %118 = vector.shape_cast %117 : vector<1x8x256xf32> to vector<8x256xf32>
    %119 = vector.shape_cast %116 : vector<8x256xf32> to vector<1x8x256xf32>
    tpu.vector_store %arg9[%c1_100, %c0_101, %c0_102], %119 {strides = array<i32>} : memref<2x8x256xf32, #tpu.memory_space<vmem>>, vector<1x8x256xf32>,
    return
  }
  func.func @transform_0(%arg0: i32) -> (i32, i32, i32) {
    %c0_i32 = arith.constant 0 : i32
    %c0_i32_0 = arith.constant 0 : i32
    %c0_i32_1 = arith.constant 0 : i32
    return %arg0, %c0_i32, %c0_i32_0 : i32, i32, i32
  }
  func.func @transform_1(%arg0: i32) -> (i32, i32, i32) {
    %c0_i32 = arith.constant 0 : i32
    %c0_i32_0 = arith.constant 0 : i32
    %c0_i32_1 = arith.constant 0 : i32
    return %arg0, %c0_i32, %c0_i32_0 : i32, i32, i32
  }
  func.func @transform_2(%arg0: i32) -> (i32, i32) {
    %c0_i32 = arith.constant 0 : i32
    %c0_i32_0 = arith.constant 0 : i32
    %c0_i32_1 = arith.constant 0 : i32
    return %c0_i32, %c0_i32_0 : i32, i32
  }
  func.func @transform_3(%arg0: i32) -> (i32, i32) {
    %c0_i32 = arith.constant 0 : i32
    %c0_i32_0 = arith.constant 0 : i32
    %c0_i32_1 = arith.constant 0 : i32
    return %c0_i32, %c0_i32_0 : i32, i32
  }
  func.func @transform_4(%arg0: i32) -> (i32, i32) {
    %c0_i32 = arith.constant 0 : i32
    %c0_i32_0 = arith.constant 0 : i32
    %c0_i32_1 = arith.constant 0 : i32
    return %c0_i32, %c0_i32_0 : i32, i32
  }
  func.func @transform_5(%arg0: i32) -> (i32, i32) {
    %c0_i32 = arith.constant 0 : i32
    %c0_i32_0 = arith.constant 0 : i32
    %c0_i32_1 = arith.constant 0 : i32
    return %c0_i32, %c0_i32_0 : i32, i32
  }
  func.func @transform_6(%arg0: i32) -> (i32, i32) {
    %c0_i32 = arith.constant 0 : i32
    %c0_i32_0 = arith.constant 0 : i32
    %c0_i32_1 = arith.constant 0 : i32
    return %c0_i32, %c0_i32_0 : i32, i32
  }
  func.func @transform_7(%arg0: i32) -> (i32, i32) {
    %c0_i32 = arith.constant 0 : i32
    %c0_i32_0 = arith.constant 0 : i32
    %c0_i32_1 = arith.constant 0 : i32
    return %c0_i32, %c0_i32_0 : i32, i32
  }
  func.func @transform_8(%arg0: i32) -> (i32, i32, i32) {
    %c0_i32 = arith.constant 0 : i32
    %c0_i32_0 = arith.constant 0 : i32
    %c0_i32_1 = arith.constant 0 : i32
    return %arg0, %c0_i32, %c0_i32_0 : i32, i32, i32
  }
}

</mosaic_0001>

<llo_original>
// kernel: dmff_forward.1
$region0: #{dmff_forward.1}
  #allocation0 [shape = 'u32[]', space=smem, size = 0x4, offset = 0x4, fixed_abs, tag = 'smem constant byte address 0x4 - core index']
  #allocation1 [shape = 'u32[144,128]{1,0:T(1,128)}', space=vmem, size = 0x12000, scoped, tag = 'internal scratch']
  #allocation2 [shape = 'f32[16,512]{1,0:T(8,128)}', space=vmem, size = 0x8000, scoped, tag = 'scratch operand']
  #allocation3 [shape = 'f32[16,768]{1,0:T(8,128)}', space=vmem, size = 0xc000, scoped, tag = 'scratch operand']
  #allocation4 [shape = 'f32[144,512]{1,0:T(8,128)}', space=vmem, size = 0x48000, scoped, tag = 'scratch operand']
  %s0 = inlined_call_operand.vmem [shape: f32[4,8,256], index: 0, kind: input, shape index: {}]
  %s1 = inlined_call_operand.vmem [shape: f32[4,8,256], index: 1, kind: input, shape index: {}]
  %s2 = inlined_call_operand.vmem [shape: f32[16,16], index: 2, kind: input, shape index: {}]
  %s3 = inlined_call_operand.vmem [shape: f32[16,1], index: 3, kind: input, shape index: {}]
  %s4 = inlined_call_operand.vmem [shape: f32[16,144], index: 4, kind: input, shape index: {}]
  %s5 = inlined_call_operand.vmem [shape: f32[16,1], index: 5, kind: input, shape index: {}]
  %s6 = inlined_call_operand.vmem [shape: f32[1,256], index: 6, kind: input, shape index: {}]
  %s7 = inlined_call_operand.vmem [shape: f32[1,256], index: 7, kind: input, shape index: {}]
  %s8 = inlined_call_operand.vmem [shape: f32[4,8,256], index: 8, kind: output, shape index: {}]
  %s9 = sld [smem:[#allocation0]]
  $region65: #{dmff_forward.1} parent=0
    _
  %s11 = ssub.s32 1, %s9
  %s12 = scalar_select 0, %s11, %s9
  loop: start=0, step=1, limit=4
  $region2: #{dmff_forward.1} parent=0 // loop_pre_header
    _
  $region3: #{dmff_forward.1} parent=0 // loop_header
    %s14 = sphi 0, %s18
    %p15 = scmp.ge.s32.totalorder %s14, 4
    %s24 = sphi 0, %s26
    %s27 = sphi 0, %s24
    %s28 = sphi 0, %s27
    %s44 = sphi 0, %s28
    %s50 = sphi 0, %s52
    %s53 = sphi 0, %s50
    %s54 = sphi 0, %s53
    %s70 = sphi 0, %s54
    %s74 = sphi 0, %s74
    %s76 = sphi 0, %s74
    %s77 = sphi 0, %s76
    %s91 = sphi 0, %s77
    %s95 = sphi 0, %s95
    %s97 = sphi 0, %s95
    %s98 = sphi 0, %s97
    %s112 = sphi 0, %s98
    %s116 = sphi 0, %s116
    %s118 = sphi 0, %s116
    %s119 = sphi 0, %s118
    %s133 = sphi 0, %s119
    %s137 = sphi 0, %s137
    %s139 = sphi 0, %s137
    %s140 = sphi 0, %s139
    %s154 = sphi 0, %s140
    %s158 = sphi 0, %s158
    %s160 = sphi 0, %s158
    %s161 = sphi 0, %s160
    %s175 = sphi 0, %s161
    %s179 = sphi 0, %s179
    %s181 = sphi 0, %s179
    %s182 = sphi 0, %s181
    %s196 = sphi 0, %s182
    %s202 = sphi 0, %s204
    %s205 = sphi 0, %s202
    %s206 = sphi 0, %s205
    %s222 = sphi 0, %s206
  $region4: #{dmff_forward.1} parent=0 // loop_header_branch
    %17 = sbr.rel (%p15) target = $region8
  $region5: #{dmff_forward.1} parent=0 // loop_body
    %s19 = ssub.s32 %s14, 1
    %s20 = ssub.s32 %s14, 2
    %s21 = sadd.s32 %s14, 1
    %s22 = ssub.s32 %s14, %s21
    %p23 = scmp.eq.s32.totalorder %s22, 0
    %s25 = sadd.s32 %s24, 1
    %s26 = scalar_select %p23, %s24, %s25
    %p29 = pneg %p23
    %p30 = scmp.eq.s32.totalorder %s14, 1
    %p31 = por %p29, %p30
    %p32 = scmp.ne.s32.totalorder %s24, %s27
    %p33 = scmp.eq.s32.totalorder %s14, 0
    %p34 = por %p32, %p33
    %p35 = scmp.ne.s32.totalorder %s24, %s27
    %p36 = scmp.eq.s32.totalorder %s19, 1
    %p37 = por %p35, %p36
    %p38 = scmp.ne.s32.totalorder %s27, %s28
    %p39 = scmp.eq.s32.totalorder %s19, 0
    %p40 = por %p38, %p39
    %p41 = scmp.ne.s32.totalorder %s27, %s28
    %p42 = scmp.eq.s32.totalorder %s20, 1
    %p43 = por %p41, %p42
    %p45 = scmp.ne.s32.totalorder %s28, %s44
    %p46 = scmp.eq.s32.totalorder %s20, 0
    %p47 = por %p45, %p46
    %s48 = ssub.s32 %s14, %s21
    %p49 = scmp.eq.s32.totalorder %s48, 0
    %s51 = sadd.s32 %s50, 1
    %s52 = scalar_select %p49, %s50, %s51
    %p55 = pneg %p49
    %p56 = scmp.eq.s32.totalorder %s14, 1
    %p57 = por %p55, %p56
    %p58 = scmp.ne.s32.totalorder %s50, %s53
    %p59 = scmp.eq.s32.totalorder %s14, 0
    %p60 = por %p58, %p59
    %p61 = scmp.ne.s32.totalorder %s50, %s53
    %p62 = scmp.eq.s32.totalorder %s19, 1
    %p63 = por %p61, %p62
    %p64 = scmp.ne.s32.totalorder %s53, %s54
    %p65 = scmp.eq.s32.totalorder %s19, 0
    %p66 = por %p64, %p65
    %p67 = scmp.ne.s32.totalorder %s53, %s54
    %p68 = scmp.eq.s32.totalorder %s20, 1
    %p69 = por %p67, %p68
    %p71 = scmp.ne.s32.totalorder %s54, %s70
    %p72 = scmp.eq.s32.totalorder %s20, 0
    %p73 = por %p71, %p72
    %s75 = sadd.s32 %s74, 1
    %p78 = scmp.eq.s32.totalorder %s14, 1
    %p79 = scmp.ne.s32.totalorder %s74, %s76
    %p80 = scmp.eq.s32.totalorder %s14, 0
    %p81 = por %p79, %p80
    %p82 = scmp.ne.s32.totalorder %s74, %s76
    %p83 = scmp.eq.s32.totalorder %s19, 1
    %p84 = por %p82, %p83
    %p85 = scmp.ne.s32.totalorder %s76, %s77
    %p86 = scmp.eq.s32.totalorder %s19, 0
    %p87 = por %p85, %p86
    %p88 = scmp.ne.s32.totalorder %s76, %s77
    %p89 = scmp.eq.s32.totalorder %s20, 1
    %p90 = por %p88, %p89
    %p92 = scmp.ne.s32.totalorder %s77, %s91
    %p93 = scmp.eq.s32.totalorder %s20, 0
    %p94 = por %p92, %p93
    %s96 = sadd.s32 %s95, 1
    %p99 = scmp.eq.s32.totalorder %s14, 1
    %p100 = scmp.ne.s32.totalorder %s95, %s97
    %p101 = scmp.eq.s32.totalorder %s14, 0
    %p102 = por %p100, %p101
    %p103 = scmp.ne.s32.totalorder %s95, %s97
    %p104 = scmp.eq.s32.totalorder %s19, 1
    %p105 = por %p103, %p104
    %p106 = scmp.ne.s32.totalorder %s97, %s98
    %p107 = scmp.eq.s32.totalorder %s19, 0
    %p108 = por %p106, %p107
    %p109 = scmp.ne.s32.totalorder %s97, %s98
    %p110 = scmp.eq.s32.totalorder %s20, 1
    %p111 = por %p109, %p110
    %p113 = scmp.ne.s32.totalorder %s98, %s112
    %p114 = scmp.eq.s32.totalorder %s20, 0
    %p115 = por %p113, %p114
    %s117 = sadd.s32 %s116, 1
    %p120 = scmp.eq.s32.totalorder %s14, 1
    %p121 = scmp.ne.s32.totalorder %s116, %s118
    %p122 = scmp.eq.s32.totalorder %s14, 0
    %p123 = por %p121, %p122
    %p124 = scmp.ne.s32.totalorder %s116, %s118
    %p125 = scmp.eq.s32.totalorder %s19, 1
    %p126 = por %p124, %p125
    %p127 = scmp.ne.s32.totalorder %s118, %s119
    %p128 = scmp.eq.s32.totalorder %s19, 0
    %p129 = por %p127, %p128
    %p130 = scmp.ne.s32.totalorder %s118, %s119
    %p131 = scmp.eq.s32.totalorder %s20, 1
    %p132 = por %p130, %p131
    %p134 = scmp.ne.s32.totalorder %s119, %s133
    %p135 = scmp.eq.s32.totalorder %s20, 0
    %p136 = por %p134, %p135
    %s138 = sadd.s32 %s137, 1
    %p141 = scmp.eq.s32.totalorder %s14, 1
    %p142 = scmp.ne.s32.totalorder %s137, %s139
    %p143 = scmp.eq.s32.totalorder %s14, 0
    %p144 = por %p142, %p143
    %p145 = scmp.ne.s32.totalorder %s137, %s139
    %p146 = scmp.eq.s32.totalorder %s19, 1
    %p147 = por %p145, %p146
    %p148 = scmp.ne.s32.totalorder %s139, %s140
    %p149 = scmp.eq.s32.totalorder %s19, 0
    %p150 = por %p148, %p149
    %p151 = scmp.ne.s32.totalorder %s139, %s140
    %p152 = scmp.eq.s32.totalorder %s20, 1
    %p153 = por %p151, %p152
    %p155 = scmp.ne.s32.totalorder %s140, %s154
    %p156 = scmp.eq.s32.totalorder %s20, 0
    %p157 = por %p155, %p156
    %s159 = sadd.s32 %s158, 1
    %p162 = scmp.eq.s32.totalorder %s14, 1
    %p163 = scmp.ne.s32.totalorder %s158, %s160
    %p164 = scmp.eq.s32.totalorder %s14, 0
    %p165 = por %p163, %p164
    %p166 = scmp.ne.s32.totalorder %s158, %s160
    %p167 = scmp.eq.s32.totalorder %s19, 1
    %p168 = por %p166, %p167
    %p169 = scmp.ne.s32.totalorder %s160, %s161
    %p170 = scmp.eq.s32.totalorder %s19, 0
    %p171 = por %p169, %p170
    %p172 = scmp.ne.s32.totalorder %s160, %s161
    %p173 = scmp.eq.s32.totalorder %s20, 1
    %p174 = por %p172, %p173
    %p176 = scmp.ne.s32.totalorder %s161, %s175
    %p177 = scmp.eq.s32.totalorder %s20, 0
    %p178 = por %p176, %p177
    %s180 = sadd.s32 %s179, 1
    %p183 = scmp.eq.s32.totalorder %s14, 1
    %p184 = scmp.ne.s32.totalorder %s179, %s181
    %p185 = scmp.eq.s32.totalorder %s14, 0
    %p186 = por %p184, %p185
    %p187 = scmp.ne.s32.totalorder %s179, %s181
    %p188 = scmp.eq.s32.totalorder %s19, 1
    %p189 = por %p187, %p188
    %p190 = scmp.ne.s32.totalorder %s181, %s182
    %p191 = scmp.eq.s32.totalorder %s19, 0
    %p192 = por %p190, %p191
    %p193 = scmp.ne.s32.totalorder %s181, %s182
    %p194 = scmp.eq.s32.totalorder %s20, 1
    %p195 = por %p193, %p194
    %p197 = scmp.ne.s32.totalorder %s182, %s196
    %p198 = scmp.eq.s32.totalorder %s20, 0
    %p199 = por %p197, %p198
    %s200 = ssub.s32 %s14, %s21
    %p201 = scmp.eq.s32.totalorder %s200, 0
    %s203 = sadd.s32 %s202, 1
    %s204 = scalar_select %p201, %s202, %s203
    %p207 = pneg %p201
    %p208 = scmp.eq.s32.totalorder %s14, 1
    %p209 = por %p207, %p208
    %p210 = scmp.ne.s32.totalorder %s202, %s205
    %p211 = scmp.eq.s32.totalorder %s14, 0
    %p212 = por %p210, %p211
    %p213 = scmp.ne.s32.totalorder %s202, %s205
    %p214 = scmp.eq.s32.totalorder %s19, 1
    %p215 = por %p213, %p214
    %p216 = scmp.ne.s32.totalorder %s205, %s206
    %p217 = scmp.eq.s32.totalorder %s19, 0
    %p218 = por %p216, %p217
    %p219 = scmp.ne.s32.totalorder %s205, %s206
    %p220 = scmp.eq.s32.totalorder %s20, 1
    %p221 = por %p219, %p220
    %p223 = scmp.ne.s32.totalorder %s206, %s222
    %p224 = scmp.eq.s32.totalorder %s20, 0
    %p225 = por %p223, %p224
    %p226 = scmp.le.s32.totalorder 1, %s14
    %p227 = scmp.lt.s32.totalorder %s14, 3
    %p228 = pnand %p226, %p227
    %p229 = pneg %p228
    // Predicated region
    $region9: #{dmff_forward.1} parent=5 // pred_check
      _
    $region10: #{dmff_forward.1} parent=5 // pred_check_branch
      %231 = sbr.rel (%p228) target = $region12
    $region11: #{dmff_forward.1} parent=5 // pred_region
      %s232 = ssub.s32 %s14, 1
      // Predicated region
      $region13: #{dmff_forward.1} parent=11 // pred_check
        %p233 = pneg %p87
      $region14: #{dmff_forward.1} parent=11 // pred_check_branch
        %235 = sbr.rel (%p233) target = $region16
      $region15: #{dmff_forward.1} parent=11 // pred_region
        _
      $region16: #{dmff_forward.1} parent=11 // pred_fallthru
        _
      // Predicated region
      $region17: #{dmff_forward.1} parent=11 // pred_check
        %p236 = pneg %p108
      $region18: #{dmff_forward.1} parent=11 // pred_check_branch
        %238 = sbr.rel (%p236) target = $region20
      $region19: #{dmff_forward.1} parent=11 // pred_region
        _
      $region20: #{dmff_forward.1} parent=11 // pred_fallthru
        _
      // Predicated region
      $region21: #{dmff_forward.1} parent=11 // pred_check
        %p239 = pneg %p129
      $region22: #{dmff_forward.1} parent=11 // pred_check_branch
        %241 = sbr.rel (%p239) target = $region24
      $region23: #{dmff_forward.1} parent=11 // pred_region
        _
      $region24: #{dmff_forward.1} parent=11 // pred_fallthru
        _
      // Predicated region
      $region25: #{dmff_forward.1} parent=11 // pred_check
        %p242 = pneg %p150
      $region26: #{dmff_forward.1} parent=11 // pred_check_branch
        %244 = sbr.rel (%p242) target = $region28
      $region27: #{dmff_forward.1} parent=11 // pred_region
        _
      $region28: #{dmff_forward.1} parent=11 // pred_fallthru
        _
      // Predicated region
      $region29: #{dmff_forward.1} parent=11 // pred_check
        %p245 = pneg %p171
      $region30: #{dmff_forward.1} parent=11 // pred_check_branch
        %247 = sbr.rel (%p245) target = $region32
      $region31: #{dmff_forward.1} parent=11 // pred_region
        _
      $region32: #{dmff_forward.1} parent=11 // pred_fallthru
        _
      // Predicated region
      $region33: #{dmff_forward.1} parent=11 // pred_check
        %p248 = pneg %p192
      $region34: #{dmff_forward.1} parent=11 // pred_check_branch
        %250 = sbr.rel (%p248) target = $region36
      $region35: #{dmff_forward.1} parent=11 // pred_region
        _
      $region36: #{dmff_forward.1} parent=11 // pred_fallthru
        _
    $region12: #{dmff_forward.1} parent=5 // pred_fallthru
      _
    %p251 = scmp.lt.s32.totalorder %s14, 2
    // Predicated region
    $region37: #{dmff_forward.1} parent=5 // pred_check
      %p252 = pneg %p251
    $region38: #{dmff_forward.1} parent=5 // pred_check_branch
      %254 = sbr.rel (%p252) target = $region40
    $region39: #{dmff_forward.1} parent=5 // pred_region
      // Predicated region
      $region41: #{dmff_forward.1} parent=39 // pred_check
        %p255 = pneg %p34
      $region42: #{dmff_forward.1} parent=39 // pred_check_branch
        %257 = sbr.rel (%p255) target = $region44
      $region43: #{dmff_forward.1} parent=39 // pred_region
        %s258 = smul.u32 2, %s14
        %p259 = scmp.lt.s32.totalorder %s258, 3
        %s260 = scalar_select %p259, %s258, 3
        %s261 = smul.addr %s260, 2
        %s262 = smul.addr %s261, 8
        %s263 = scalar_lea.vmem %s0, %s262
        %s264 = smul.u32 2, %s14
      $region44: #{dmff_forward.1} parent=39 // pred_fallthru
        _
      // Predicated region
      $region45: #{dmff_forward.1} parent=39 // pred_check
        %p265 = pneg %p60
      $region46: #{dmff_forward.1} parent=39 // pred_check_branch
        %267 = sbr.rel (%p265) target = $region48
      $region47: #{dmff_forward.1} parent=39 // pred_region
        %s268 = smul.u32 2, %s14
        %p269 = scmp.lt.s32.totalorder %s268, 3
        %s270 = scalar_select %p269, %s268, 3
        %s271 = smul.addr %s270, 2
        %s272 = smul.addr %s271, 8
        %s273 = scalar_lea.vmem %s1, %s272
        %s274 = smul.u32 2, %s14
      $region48: #{dmff_forward.1} parent=39 // pred_fallthru
        _
    $region40: #{dmff_forward.1} parent=5 // pred_fallthru
      _
    %p275 = scmp.le.s32.totalorder 1, %s14
    %p276 = scmp.lt.s32.totalorder %s14, 3
    %p277 = pnand %p275, %p276
    %p278 = pneg %p277
    // Predicated region
    $region49: #{dmff_forward.1} parent=5 // pred_check
      _
    $region50: #{dmff_forward.1} parent=5 // pred_check_branch
      %280 = sbr.rel (%p277) target = $region52
    $region51: #{dmff_forward.1} parent=5 // pred_region
      %s281 = ssub.s32 %s14, 1
      %s282 = smul.u32 2, %s19
      %p283 = scmp.lt.s32.totalorder %s282, 3
      %s284 = scalar_select %p283, %s282, 3
      %s285 = smul.addr %s284, 2
      %s286 = smul.addr %s285, 8
      %s287 = scalar_lea.vmem %s0, %s286
      %p288 = pneg %p40
      %p289 = pneg %p37
      %s290 = smul.u32 2, %s19
      %p291 = scmp.lt.s32.totalorder %s290, 3
      %s292 = scalar_select %p291, %s290, 3
      %s293 = smul.addr %s292, 2
      %s294 = smul.addr %s293, 8
      %s295 = scalar_lea.vmem %s1, %s294
      %p296 = pneg %p66
      %p297 = pneg %p63
      %p298 = pneg %p87
      %p299 = pneg %p84
      %p300 = pneg %p108
      %p301 = pneg %p105
      %p302 = pneg %p129
      %p303 = pneg %p126
      %p304 = pneg %p150
      %p305 = pneg %p147
      %p306 = pneg %p171
      %p307 = pneg %p168
      %p308 = pneg %p192
      %p309 = pneg %p189
      %p310 = pneg %p218
      %p311 = pneg %p215
      %s312 = smul.u32 2, %s19
      %p313 = scmp.lt.s32.totalorder %s312, 3
      %s314 = scalar_select %p313, %s312, 3
      %s315 = smul.addr %s314, 2
      %s316 = smul.addr %s315, 8
      %s317 = scalar_lea.vmem %s8, %s316
      %s318 = smul.u32 2, %s19
      %p319 = scmp.lt.s32.totalorder %s318, 3
      %s320 = scalar_select %p319, %s318, 3
      %s321 = smul.addr %s320, 2
      %s322 = smul.addr %s321, 8
      %s323 = scalar_lea.vmem %s0, %s322
      %s324 = smul.u32 2, %s19
      %s325 = smul.u32 2, %s19
      %p326 = scmp.lt.s32.totalorder %s325, 3
      %s327 = scalar_select %p326, %s325, 3
      %s328 = smul.addr %s327, 2
      %s329 = smul.addr %s328, 8
      %s330 = scalar_lea.vmem %s1, %s329
      %s331 = smul.u32 2, %s19
      %s332 = smul.u32 2, %s19
      %p333 = scmp.lt.s32.totalorder %s332, 3
      %s334 = scalar_select %p333, %s332, 3
      %s335 = smul.addr %s334, 2
      %s336 = smul.addr %s335, 8
      %s337 = scalar_lea.vmem %s8, %s336
      %s338 = smul.u32 2, %s19
      %v339 = vld [vmem:[%s323] sm:$0xff]
      %v340 = vld [vmem:[%s323 + $0x8] sm:$0xff]
      %341 = vst [vmem:[#allocation2] sm:$0xff] %v339
      %342 = vst [vmem:[#allocation2 + $0x8] sm:$0xff] %v340
      %v343 = vld [vmem:[%s330] sm:$0xff]
      %v344 = vld [vmem:[%s330 + $0x8] sm:$0xff]
      %345 = vst [vmem:[#allocation2 + $0x20] sm:$0xff] %v343
      %346 = vst [vmem:[#allocation2 + $0x28] sm:$0xff] %v344
      %s347 = scalar_lea.vmem %s323, 16
      %v348 = vld [vmem:[%s347] sm:$0xff]
      %v349 = vld [vmem:[%s347 + $0x8] sm:$0xff]
      %350 = vst [vmem:[#allocation2 + $0x10] sm:$0xff] %v348
      %351 = vst [vmem:[#allocation2 + $0x18] sm:$0xff] %v349
      %s352 = scalar_lea.vmem %s330, 16
      %v353 = vld [vmem:[%s352] sm:$0xff]
      %v354 = vld [vmem:[%s352 + $0x8] sm:$0xff]
      %355 = vst [vmem:[#allocation2 + $0x30] sm:$0xff] %v353
      %356 = vst [vmem:[#allocation2 + $0x38] sm:$0xff] %v354
      %v357 = vld [vmem:[%s2] sm:$0xff]
      %v358 = vld [vmem:[%s2 + $0x8] sm:$0xff]
      %v359 = vld [vmem:[#allocation2] sm:$0xff]
      %v360 = vld [vmem:[#allocation2 + $0x8] sm:$0xff]
      %v361 = vld [vmem:[#allocation2 + $0x10] sm:$0xff]
      %v362 = vld [vmem:[#allocation2 + $0x18] sm:$0xff]
      %v363 = vld [vmem:[#allocation2 + $0x20] sm:$0xff]
      %v364 = vld [vmem:[#allocation2 + $0x28] sm:$0xff]
      %v365 = vld [vmem:[#allocation2 + $0x30] sm:$0xff]
      %v366 = vld [vmem:[#allocation2 + $0x38] sm:$0xff]
      %v367 = vld [vmem:[%s3] sm:$0xff]
      %v368 = vld [vmem:[%s3 + $0x8] sm:$0xff]
      %370 = vset.pattern.permute.xlu0 0
      %371 = vperm.xlu0 %370, %v367
      %v372 = vpop.permute.xlu0 %371
      %375 = vset.pattern.permute.xlu0 0
      %376 = vperm.xlu0 %375, %v368
      %v377 = vpop.permute.xlu0 %376
      %vm379 = vcmask 130048
      %v381 = vsel %vm379, %v357, 0
      %v384 = vsel %vm379, %v358, 0
      %386 = vmatprep.subr.mxu0 %v360
      %387 = vmatpush1.msra.mxu0 %v359
      %388 = vmatprep.subr.mxu0 %v364
      %389 = vmatpush1.msra.mxu0 %v363
      %390 = vmatprep.subr.mxu0 0.0
      %391 = vmatpush1.msra.mxu0 0.0
      %392 = vmatprep.subr.mxu0 0.0
      %393 = vmatpush1.msra.mxu0 0.0
      %394 = vmatprep.subr.mxu0 0.0
      %395 = vmatpush1.msra.mxu0 0.0
      %396 = vmatprep.subr.mxu0 0.0
      %397 = vmatpush1.msra.mxu0 0.0
      %398 = vmatprep.subr.mxu0 0.0
      %399 = vmatpush1.msra.mxu0 0.0
      %400 = vmatprep.subr.mxu0 0.0
      %401 = vmatpush1.msra.mxu0 0.0
      %402 = vmatprep.subr.mxu0 0.0
      %403 = vmatpush1.msra.mxu0 0.0
      %404 = vmatprep.subr.mxu0 0.0
      %405 = vmatpush1.msra.mxu0 0.0
      %406 = vmatprep.subr.mxu0 0.0
      %407 = vmatpush1.msra.mxu0 0.0
      %408 = vmatprep.subr.mxu0 0.0
      %409 = vmatpush1.msra.mxu0 0.0
      %410 = vmatprep.subr.mxu0 0.0
      %411 = vmatpush1.msra.mxu0 0.0
      %412 = vmatprep.subr.mxu0 0.0
      %413 = vmatpush1.msra.mxu0 0.0
      %414 = vmatprep.subr.mxu0 0.0
      %415 = vmatpush1.msra.mxu0 0.0
      %416 = vmatprep.subr.mxu0 0.0
      %417 = vmatpush1.msra.mxu0 0.0
      %418 = vmatprep.subr.mxu0 0.0
      %419 = vmatpush1.msra.mxu0 0.0
      %420 = vmatprep.subr.mxu0 0.0
      %421 = vmatpush1.msra.mxu0 0.0
      %422 = vmatprep.subr.mxu0 0.0
      %423 = vmatpush1.msra.mxu0 0.0
      %424 = vmatprep.subr.mxu0 0.0
      %425 = vmatpush1.msra.mxu0 0.0
      %426 = vmatprep.subr.mxu0 0.0
      %427 = vmatpush1.msra.mxu0 0.0
      %428 = vmatprep.subr.mxu0 0.0
      %429 = vmatpush1.msra.mxu0 0.0
      %430 = vmatprep.subr.mxu0 0.0
      %431 = vmatpush1.msra.mxu0 0.0
      %432 = vmatprep.subr.mxu0 0.0
      %433 = vmatpush1.msra.mxu0 0.0
      %434 = vmatprep.subr.mxu0 0.0
      %435 = vmatpush1.msra.mxu0 0.0
      %436 = vmatprep.subr.mxu0 0.0
      %437 = vmatpush1.msra.mxu0 0.0
      %438 = vmatprep.subr.mxu0 0.0
      %439 = vmatpush1.msra.mxu0 0.0
      %440 = vmatprep.subr.mxu0 0.0
      %441 = vmatpush1.msra.mxu0 0.0
      %442 = vmatprep.subr.mxu0 0.0
      %443 = vmatpush1.msra.mxu0 0.0
      %444 = vmatprep.subr.mxu0 0.0
      %445 = vmatpush1.msra.mxu0 0.0
      %446 = vmatprep.subr.mxu0 0.0
      %447 = vmatpush1.msra.mxu0 0.0
      %448 = vmatprep.subr.mxu0 0.0
      %449 = vmatpush1.msra.mxu0 0.0
      %450 = vmatprep.mubr.f32.mxu0 0.0
      %451 = vmatmul.mubr.f32.gmra.mrb[0].mxu0 %v381
      %v452 = vpop.f32.mrb[0].mxu0
      %v453 = vadd.f32 %v372, %v452
      %v454 = vpop.f32.mrb[0].mxu0
      %v455 = vadd.f32 %v372, %v454
      %456 = vmatprep.mubr.f32.mxu0 0.0
      %457 = vmatmul.mubr.f32.gmra.mrb[0].mxu0 %v384
      %v458 = vpop.f32.mrb[0].mxu0
      %v459 = vadd.f32 %v377, %v458
      %v460 = vpop.f32.mrb[0].mxu0
      %v461 = vadd.f32 %v377, %v460
      %462 = vdwg.mxu0
      %463 = vmatprep.subr.mxu0 %v362
      %464 = vmatpush1.msra.mxu0 %v361
      %465 = vmatprep.subr.mxu0 %v366
      %466 = vmatpush1.msra.mxu0 %v365
      %467 = vmatprep.subr.mxu0 0.0
      %468 = vmatpush1.msra.mxu0 0.0
      %469 = vmatprep.subr.mxu0 0.0
      %470 = vmatpush1.msra.mxu0 0.0
      %471 = vmatprep.subr.mxu0 0.0
      %472 = vmatpush1.msra.mxu0 0.0
      %473 = vmatprep.subr.mxu0 0.0
      %474 = vmatpush1.msra.mxu0 0.0
      %475 = vmatprep.subr.mxu0 0.0
      %476 = vmatpush1.msra.mxu0 0.0
      %477 = vmatprep.subr.mxu0 0.0
      %478 = vmatpush1.msra.mxu0 0.0
      %479 = vmatprep.subr.mxu0 0.0
      %480 = vmatpush1.msra.mxu0 0.0
      %481 = vmatprep.subr.mxu0 0.0
      %482 = vmatpush1.msra.mxu0 0.0
      %483 = vmatprep.subr.mxu0 0.0
      %484 = vmatpush1.msra.mxu0 0.0
      %485 = vmatprep.subr.mxu0 0.0
      %486 = vmatpush1.msra.mxu0 0.0
      %487 = vmatprep.subr.mxu0 0.0
      %488 = vmatpush1.msra.mxu0 0.0
      %489 = vmatprep.subr.mxu0 0.0
      %490 = vmatpush1.msra.mxu0 0.0
      %491 = vmatprep.subr.mxu0 0.0
      %492 = vmatpush1.msra.mxu0 0.0
      %493 = vmatprep.subr.mxu0 0.0
      %494 = vmatpush1.msra.mxu0 0.0
      %495 = vmatprep.subr.mxu0 0.0
      %496 = vmatpush1.msra.mxu0 0.0
      %497 = vmatprep.subr.mxu0 0.0
      %498 = vmatpush1.msra.mxu0 0.0
      %499 = vmatprep.subr.mxu0 0.0
      %500 = vmatpush1.msra.mxu0 0.0
      %501 = vmatprep.subr.mxu0 0.0
      %502 = vmatpush1.msra.mxu0 0.0
      %503 = vmatprep.subr.mxu0 0.0
      %504 = vmatpush1.msra.mxu0 0.0
      %505 = vmatprep.subr.mxu0 0.0
      %506 = vmatpush1.msra.mxu0 0.0
      %507 = vmatprep.subr.mxu0 0.0
      %508 = vmatpush1.msra.mxu0 0.0
      %509 = vmatprep.subr.mxu0 0.0
      %510 = vmatpush1.msra.mxu0 0.0
      %511 = vmatprep.subr.mxu0 0.0
      %512 = vmatpush1.msra.mxu0 0.0
      %513 = vmatprep.subr.mxu0 0.0
      %514 = vmatpush1.msra.mxu0 0.0
      %515 = vmatprep.subr.mxu0 0.0
      %516 = vmatpush1.msra.mxu0 0.0
      %517 = vmatprep.subr.mxu0 0.0
      %518 = vmatpush1.msra.mxu0 0.0
      %519 = vmatprep.subr.mxu0 0.0
      %520 = vmatpush1.msra.mxu0 0.0
      %521 = vmatprep.subr.mxu0 0.0
      %522 = vmatpush1.msra.mxu0 0.0
      %523 = vmatprep.subr.mxu0 0.0
      %524 = vmatpush1.msra.mxu0 0.0
      %525 = vmatprep.subr.mxu0 0.0
      %526 = vmatpush1.msra.mxu0 0.0
      %527 = vmatprep.mubr.f32.mxu0 0.0
      %528 = vmatmul.mubr.f32.gmra.mrb[0].mxu0 %v381
      %v529 = vpop.f32.mrb[0].mxu0
      %v530 = vadd.f32 %v372, %v529
      %v531 = vpop.f32.mrb[0].mxu0
      %v532 = vadd.f32 %v372, %v531
      %533 = vmatprep.mubr.f32.mxu0 0.0
      %534 = vmatmul.mubr.f32.gmra.mrb[0].mxu0 %v384
      %v535 = vpop.f32.mrb[0].mxu0
      %v536 = vadd.f32 %v377, %v535
      %v537 = vpop.f32.mrb[0].mxu0
      %v538 = vadd.f32 %v377, %v537
      %539 = vdwg.mxu0
      %vm540 = vcmp.ge.f32.partialorder %v453, 0.0
      %vm541 = vcmp.ge.f32.partialorder %v455, 0.0
      %vm542 = vcmp.ge.f32.partialorder %v530, 0.0
      %vm543 = vcmp.ge.f32.partialorder %v532, 0.0
      %vm544 = vcmp.ge.f32.partialorder %v459, 0.0
      %vm545 = vcmp.ge.f32.partialorder %v461, 0.0
      %vm546 = vcmp.ge.f32.partialorder %v536, 0.0
      %vm547 = vcmp.ge.f32.partialorder %v538, 0.0
      %v548 = vmul.f32 %v453, 0.1
      %v549 = vmul.f32 %v455, 0.1
      %v550 = vmul.f32 %v530, 0.1
      %v551 = vmul.f32 %v532, 0.1
      %v552 = vmul.f32 %v459, 0.1
      %v553 = vmul.f32 %v461, 0.1
      %v554 = vmul.f32 %v536, 0.1
      %v555 = vmul.f32 %v538, 0.1
      %v556 = vsel %vm540, %v453, %v548
      %v557 = vsel %vm541, %v455, %v549
      %v558 = vsel %vm542, %v530, %v550
      %v559 = vsel %vm543, %v532, %v551
      %v560 = vsel %vm544, %v459, %v552
      %v561 = vsel %vm545, %v461, %v553
      %v562 = vsel %vm546, %v536, %v554
      %v563 = vsel %vm547, %v538, %v555
      %vm564 = vcmask 138240
      %565 = vst.msk [vmem:[#allocation3] sm:$0xff] %vm564, 0.0
      %566 = vst.msk [vmem:[#allocation3 + $0x30] sm:$0xff] %vm564, 0.0
      %vm567 = vcmask 277640
      %568 = vst.msk [vmem:[#allocation3 + $0x10] sm:$0xff] %vm567, 0.0
      %569 = vst.msk [vmem:[#allocation3 + $0x40] sm:$0xff] %vm567, 0.0
      %574 = vrot.lane.b32.xlu0 %v556, 17
      %v575 = vpop.permute.xlu0 %574
      %576 = vrot.lane.b32.xlu0 %v557, 17
      %v577 = vpop.permute.xlu0 %576
      %578 = vrot.lane.b32.xlu0 %v560, 17
      %v579 = vpop.permute.xlu0 %578
      %580 = vrot.lane.b32.xlu0 %v561, 17
      %v581 = vpop.permute.xlu0 %580
      %v582 = vsel %vm564, %v575, %v577
      %v583 = vsel %vm564, %v579, %v581
      %vm590 = vcmask 1047688
      %591 = vst.msk [vmem:[#allocation3] sm:$0xff] %vm590, %v575
      %592 = vst [vmem:[#allocation3 + $0x8] sm:$0xff] %v582
      %593 = vst.msk [vmem:[#allocation3 + $0x10] sm:$0xff] %vm564, %v577
      %594 = vst.msk [vmem:[#allocation3 + $0x30] sm:$0xff] %vm590, %v579
      %595 = vst [vmem:[#allocation3 + $0x38] sm:$0xff] %v583
      %596 = vst.msk [vmem:[#allocation3 + $0x40] sm:$0xff] %vm564, %v581
      %597 = vst.msk [vmem:[#allocation3 + $0x18] sm:$0xff] %vm564, 0.0
      %598 = vst.msk [vmem:[#allocation3 + $0x48] sm:$0xff] %vm564, 0.0
      %599 = vst.msk [vmem:[#allocation3 + $0x28] sm:$0xff] %vm567, 0.0
      %600 = vst.msk [vmem:[#allocation3 + $0x58] sm:$0xff] %vm567, 0.0
      %605 = vrot.lane.b32.xlu0 %v558, 17
      %v606 = vpop.permute.xlu0 %605
      %607 = vrot.lane.b32.xlu0 %v559, 17
      %v608 = vpop.permute.xlu0 %607
      %609 = vrot.lane.b32.xlu0 %v562, 17
      %v610 = vpop.permute.xlu0 %609
      %611 = vrot.lane.b32.xlu0 %v563, 17
      %v612 = vpop.permute.xlu0 %611
      %v613 = vsel %vm564, %v606, %v608
      %v614 = vsel %vm564, %v610, %v612
      %621 = vst.msk [vmem:[#allocation3 + $0x18] sm:$0xff] %vm590, %v606
      %622 = vst [vmem:[#allocation3 + $0x20] sm:$0xff] %v613
      %623 = vst.msk [vmem:[#allocation3 + $0x28] sm:$0xff] %vm564, %v608
      %624 = vst.msk [vmem:[#allocation3 + $0x48] sm:$0xff] %vm590, %v610
      %625 = vst [vmem:[#allocation3 + $0x50] sm:$0xff] %v614
      %626 = vst.msk [vmem:[#allocation3 + $0x58] sm:$0xff] %vm564, %v612
      %v627 = vld [vmem:[%s6] sm:$0x3]
      %v628 = vld [vmem:[%s7] sm:$0x3]
      %v629 = vld [vmem:[#allocation3] sm:$0xff]
      %v630 = vld [vmem:[#allocation3 + $0x8] sm:$0xff]
      %v631 = vld [vmem:[#allocation3 + $0x30] sm:$0xff]
      %v632 = vld [vmem:[#allocation3 + $0x38] sm:$0xff]
      %v634 = vlaneseq
      %v635 = vshrl.u32 %v634, 7
      %v636 = vsub.s32 0, %v635
      %v637 = vrot.slane %v627, %v636
      %v638 = vlaneseq
      %v639 = vshrl.u32 %v638, 7
      %v640 = vsub.s32 1, %v639
      %v641 = vrot.slane %v627, %v640
      %v644 = vmul.f32 %v629, %v637
      %v645 = vmul.f32 %v630, %v641
      %v646 = vmul.f32 %v631, %v637
      %v647 = vmul.f32 %v632, %v641
      %648 = vst [vmem:[#allocation4] sm:$0xff] %v644
      %649 = vst [vmem:[#allocation4 + $0x8] sm:$0xff] %v645
      %650 = vst [vmem:[#allocation4 + $0x20] sm:$0xff] %v646
      %651 = vst [vmem:[#allocation4 + $0x28] sm:$0xff] %v647
      %v652 = vld [vmem:[#allocation3] sm:$0xff]
      %v653 = vld [vmem:[#allocation3 + $0x8] sm:$0xff]
      %v654 = vld [vmem:[#allocation3 + $0x10] sm:$0xff]
      %v655 = vld [vmem:[#allocation3 + $0x30] sm:$0xff]
      %v656 = vld [vmem:[#allocation3 + $0x38] sm:$0xff]
      %v657 = vld [vmem:[#allocation3 + $0x40] sm:$0xff]
      %664 = vrot.lane.b32.xlu0 %v652, 127
      %v665 = vpop.permute.xlu0 %664
      %666 = vrot.lane.b32.xlu0 %v653, 127
      %v667 = vpop.permute.xlu0 %666
      %668 = vrot.lane.b32.xlu0 %v654, 127
      %v669 = vpop.permute.xlu0 %668
      %670 = vrot.lane.b32.xlu0 %v655, 127
      %v671 = vpop.permute.xlu0 %670
      %672 = vrot.lane.b32.xlu0 %v656, 127
      %v673 = vpop.permute.xlu0 %672
      %674 = vrot.lane.b32.xlu0 %v657, 127
      %v675 = vpop.permute.xlu0 %674
      %vm676 = vcmask 1039360
      %v677 = vsel %vm676, %v665, %v667
      %v678 = vsel %vm676, %v667, %v669
      %v679 = vsel %vm676, %v671, %v673
      %v680 = vsel %vm676, %v673, %v675
      %685 = vst [vmem:[#allocation4 + $0x40] sm:$0xff] %v677
      %686 = vst [vmem:[#allocation4 + $0x48] sm:$0xff] %v678
      %687 = vst [vmem:[#allocation4 + $0x60] sm:$0xff] %v679
      %688 = vst [vmem:[#allocation4 + $0x68] sm:$0xff] %v680
      %v689 = vld [vmem:[#allocation3] sm:$0xff]
      %v690 = vld [vmem:[#allocation3 + $0x8] sm:$0xff]
      %v691 = vld [vmem:[#allocation3 + $0x10] sm:$0xff]
      %v692 = vld [vmem:[#allocation3 + $0x30] sm:$0xff]
      %v693 = vld [vmem:[#allocation3 + $0x38] sm:$0xff]
      %v694 = vld [vmem:[#allocation3 + $0x40] sm:$0xff]
      %v696 = vlaneseq
      %v697 = vshrl.u32 %v696, 7
      %v698 = vsub.s32 0, %v697
      %v699 = vrot.slane %v628, %v698
      %v700 = vlaneseq
      %v701 = vshrl.u32 %v700, 7
      %v702 = vsub.s32 1, %v701
      %v703 = vrot.slane %v628, %v702
      %704 = vrot.lane.b32.xlu0 %v699, 2
      %v705 = vpop.permute.xlu0 %704
      %706 = vrot.lane.b32.xlu0 %v703, 2
      %v707 = vpop.permute.xlu0 %706
      %vm708 = vcmask 15360
      %v709 = vsel %vm708, %v705, %v707
      %v713 = vmul.f32 %v689, %v705
      %v714 = vmul.f32 %v690, %v709
      %v715 = vmul.f32 %v691, %v707
      %v716 = vmul.f32 %v692, %v705
      %v717 = vmul.f32 %v693, %v709
      %v718 = vmul.f32 %v694, %v707
      %725 = vrot.lane.b32.xlu0 %v713, 126
      %v726 = vpop.permute.xlu0 %725
      %727 = vrot.lane.b32.xlu0 %v714, 126
      %v728 = vpop.permute.xlu0 %727
      %729 = vrot.lane.b32.xlu0 %v715, 126
      %v730 = vpop.permute.xlu0 %729
      %731 = vrot.lane.b32.xlu0 %v716, 126
      %v732 = vpop.permute.xlu0 %731
      %733 = vrot.lane.b32.xlu0 %v717, 126
      %v734 = vpop.permute.xlu0 %733
      %735 = vrot.lane.b32.xlu0 %v718, 126
      %v736 = vpop.permute.xlu0 %735
      %vm737 = vcmask 1031168
      %v738 = vsel %vm737, %v726, %v728
      %v739 = vsel %vm737, %v728, %v730
      %v740 = vsel %vm737, %v732, %v734
      %v741 = vsel %vm737, %v734, %v736
      %746 = vst [vmem:[#allocation4 + $0x80] sm:$0xff] %v738
      %747 = vst [vmem:[#allocation4 + $0x88] sm:$0xff] %v739
      %748 = vst [vmem:[#allocation4 + $0xa0] sm:$0xff] %v740
      %749 = vst [vmem:[#allocation4 + $0xa8] sm:$0xff] %v741
      %v750 = vld [vmem:[#allocation3] sm:$0xff]
      %v751 = vld [vmem:[#allocation3 + $0x8] sm:$0xff]
      %v752 = vld [vmem:[#allocation3 + $0x10] sm:$0xff]
      %v753 = vld [vmem:[#allocation3 + $0x30] sm:$0xff]
      %v754 = vld [vmem:[#allocation3 + $0x38] sm:$0xff]
      %v755 = vld [vmem:[#allocation3 + $0x40] sm:$0xff]
      %756 = vrot.lane.b32.xlu0 %v637, 16
      %v757 = vpop.permute.xlu0 %756
      %758 = vrot.lane.b32.xlu0 %v641, 16
      %v759 = vpop.permute.xlu0 %758
      %v760 = vsel %vm379, %v757, %v759
      %v764 = vmul.f32 %v750, %v757
      %v765 = vmul.f32 %v751, %v760
      %v766 = vmul.f32 %v752, %v759
      %v767 = vmul.f32 %v753, %v757
      %v768 = vmul.f32 %v754, %v760
      %v769 = vmul.f32 %v755, %v759
      %776 = vrot.lane.b32.xlu0 %v764, 112
      %v777 = vpop.permute.xlu0 %776
      %778 = vrot.lane.b32.xlu0 %v765, 112
      %v779 = vpop.permute.xlu0 %778
      %780 = vrot.lane.b32.xlu0 %v766, 112
      %v781 = vpop.permute.xlu0 %780
      %782 = vrot.lane.b32.xlu0 %v767, 112
      %v783 = vpop.permute.xlu0 %782
      %784 = vrot.lane.b32.xlu0 %v768, 112
      %v785 = vpop.permute.xlu0 %784
      %786 = vrot.lane.b32.xlu0 %v769, 112
      %v787 = vpop.permute.xlu0 %786
      %vm788 = vcmask 916480
      %v789 = vsel %vm788, %v777, %v779
      %v790 = vsel %vm788, %v779, %v781
      %v791 = vsel %vm788, %v783, %v785
      %v792 = vsel %vm788, %v785, %v787
      %797 = vst [vmem:[#allocation4 + $0xc0] sm:$0xff] %v789
      %798 = vst [vmem:[#allocation4 + $0xc8] sm:$0xff] %v790
      %799 = vst [vmem:[#allocation4 + $0xe0] sm:$0xff] %v791
      %800 = vst [vmem:[#allocation4 + $0xe8] sm:$0xff] %v792
      %v801 = vld [vmem:[#allocation3] sm:$0xff]
      %v802 = vld [vmem:[#allocation3 + $0x8] sm:$0xff]
      %v803 = vld [vmem:[#allocation3 + $0x10] sm:$0xff]
      %v804 = vld [vmem:[#allocation3 + $0x30] sm:$0xff]
      %v805 = vld [vmem:[#allocation3 + $0x38] sm:$0xff]
      %v806 = vld [vmem:[#allocation3 + $0x40] sm:$0xff]
      %813 = vrot.lane.b32.xlu0 %v801, 111
      %v814 = vpop.permute.xlu0 %813
      %815 = vrot.lane.b32.xlu0 %v802, 111
      %v816 = vpop.permute.xlu0 %815
      %817 = vrot.lane.b32.xlu0 %v803, 111
      %v818 = vpop.permute.xlu0 %817
      %819 = vrot.lane.b32.xlu0 %v804, 111
      %v820 = vpop.permute.xlu0 %819
      %821 = vrot.lane.b32.xlu0 %v805, 111
      %v822 = vpop.permute.xlu0 %821
      %823 = vrot.lane.b32.xlu0 %v806, 111
      %v824 = vpop.permute.xlu0 %823
      %vm825 = vcmask 908288
      %v826 = vsel %vm825, %v814, %v816
      %v827 = vsel %vm825, %v816, %v818
      %v828 = vsel %vm825, %v820, %v822
      %v829 = vsel %vm825, %v822, %v824
      %834 = vst [vmem:[#allocation4 + $0x100] sm:$0xff] %v826
      %835 = vst [vmem:[#allocation4 + $0x108] sm:$0xff] %v827
      %836 = vst [vmem:[#allocation4 + $0x120] sm:$0xff] %v828
      %837 = vst [vmem:[#allocation4 + $0x128] sm:$0xff] %v829
      %v838 = vld [vmem:[#allocation3] sm:$0xff]
      %v839 = vld [vmem:[#allocation3 + $0x8] sm:$0xff]
      %v840 = vld [vmem:[#allocation3 + $0x10] sm:$0xff]
      %v841 = vld [vmem:[#allocation3 + $0x30] sm:$0xff]
      %v842 = vld [vmem:[#allocation3 + $0x38] sm:$0xff]
      %v843 = vld [vmem:[#allocation3 + $0x40] sm:$0xff]
      %844 = vrot.lane.b32.xlu0 %v699, 18
      %v845 = vpop.permute.xlu0 %844
      %846 = vrot.lane.b32.xlu0 %v703, 18
      %v847 = vpop.permute.xlu0 %846
      %vm848 = vcmask 146432
      %v849 = vsel %vm848, %v845, %v847
      %v853 = vmul.f32 %v838, %v845
      %v854 = vmul.f32 %v839, %v849
      %v855 = vmul.f32 %v840, %v847
      %v856 = vmul.f32 %v841, %v845
      %v857 = vmul.f32 %v842, %v849
      %v858 = vmul.f32 %v843, %v847
      %865 = vrot.lane.b32.xlu0 %v853, 110
      %v866 = vpop.permute.xlu0 %865
      %867 = vrot.lane.b32.xlu0 %v854, 110
      %v868 = vpop.permute.xlu0 %867
      %869 = vrot.lane.b32.xlu0 %v855, 110
      %v870 = vpop.permute.xlu0 %869
      %871 = vrot.lane.b32.xlu0 %v856, 110
      %v872 = vpop.permute.xlu0 %871
      %873 = vrot.lane.b32.xlu0 %v857, 110
      %v874 = vpop.permute.xlu0 %873
      %875 = vrot.lane.b32.xlu0 %v858, 110
      %v876 = vpop.permute.xlu0 %875
      %vm877 = vcmask 900096
      %v878 = vsel %vm877, %v866, %v868
      %v879 = vsel %vm877, %v868, %v870
      %v880 = vsel %vm877, %v872, %v874
      %v881 = vsel %vm877, %v874, %v876
      %886 = vst [vmem:[#allocation4 + $0x140] sm:$0xff] %v878
      %887 = vst [vmem:[#allocation4 + $0x148] sm:$0xff] %v879
      %888 = vst [vmem:[#allocation4 + $0x160] sm:$0xff] %v880
      %889 = vst [vmem:[#allocation4 + $0x168] sm:$0xff] %v881
      %v890 = vld [vmem:[#allocation3] sm:$0xff]
      %v891 = vld [vmem:[#allocation3 + $0x8] sm:$0xff]
      %v892 = vld [vmem:[#allocation3 + $0x10] sm:$0xff]
      %v893 = vld [vmem:[#allocation3 + $0x30] sm:$0xff]
      %v894 = vld [vmem:[#allocation3 + $0x38] sm:$0xff]
      %v895 = vld [vmem:[#allocation3 + $0x40] sm:$0xff]
      %896 = vrot.lane.b32.xlu0 %v637, 32
      %v897 = vpop.permute.xlu0 %896
      %898 = vrot.lane.b32.xlu0 %v641, 32
      %v899 = vpop.permute.xlu0 %898
      %vm900 = vcmask 261120
      %v901 = vsel %vm900, %v897, %v899
      %v905 = vmul.f32 %v890, %v897
      %v906 = vmul.f32 %v891, %v901
      %v907 = vmul.f32 %v892, %v899
      %v908 = vmul.f32 %v893, %v897
      %v909 = vmul.f32 %v894, %v901
      %v910 = vmul.f32 %v895, %v899
      %917 = vrot.lane.b32.xlu0 %v905, 96
      %v918 = vpop.permute.xlu0 %917
      %919 = vrot.lane.b32.xlu0 %v906, 96
      %v920 = vpop.permute.xlu0 %919
      %921 = vrot.lane.b32.xlu0 %v907, 96
      %v922 = vpop.permute.xlu0 %921
      %923 = vrot.lane.b32.xlu0 %v908, 96
      %v924 = vpop.permute.xlu0 %923
      %925 = vrot.lane.b32.xlu0 %v909, 96
      %v926 = vpop.permute.xlu0 %925
      %927 = vrot.lane.b32.xlu0 %v910, 96
      %v928 = vpop.permute.xlu0 %927
      %vm929 = vcmask 785408
      %v930 = vsel %vm929, %v918, %v920
      %v931 = vsel %vm929, %v920, %v922
      %v932 = vsel %vm929, %v924, %v926
      %v933 = vsel %vm929, %v926, %v928
      %938 = vst [vmem:[#allocation4 + $0x180] sm:$0xff] %v930
      %939 = vst [vmem:[#allocation4 + $0x188] sm:$0xff] %v931
      %940 = vst [vmem:[#allocation4 + $0x1a0] sm:$0xff] %v932
      %941 = vst [vmem:[#allocation4 + $0x1a8] sm:$0xff] %v933
      %v942 = vld [vmem:[#allocation3] sm:$0xff]
      %v943 = vld [vmem:[#allocation3 + $0x8] sm:$0xff]
      %v944 = vld [vmem:[#allocation3 + $0x10] sm:$0xff]
      %v945 = vld [vmem:[#allocation3 + $0x30] sm:$0xff]
      %v946 = vld [vmem:[#allocation3 + $0x38] sm:$0xff]
      %v947 = vld [vmem:[#allocation3 + $0x40] sm:$0xff]
      %954 = vrot.lane.b32.xlu0 %v942, 95
      %v955 = vpop.permute.xlu0 %954
      %956 = vrot.lane.b32.xlu0 %v943, 95
      %v957 = vpop.permute.xlu0 %956
      %958 = vrot.lane.b32.xlu0 %v944, 95
      %v959 = vpop.permute.xlu0 %958
      %960 = vrot.lane.b32.xlu0 %v945, 95
      %v961 = vpop.permute.xlu0 %960
      %962 = vrot.lane.b32.xlu0 %v946, 95
      %v963 = vpop.permute.xlu0 %962
      %964 = vrot.lane.b32.xlu0 %v947, 95
      %v965 = vpop.permute.xlu0 %964
      %vm966 = vcmask 777216
      %v967 = vsel %vm966, %v955, %v957
      %v968 = vsel %vm966, %v957, %v959
      %v969 = vsel %vm966, %v961, %v963
      %v970 = vsel %vm966, %v963, %v965
      %975 = vst [vmem:[#allocation4 + $0x1c0] sm:$0xff] %v967
      %976 = vst [vmem:[#allocation4 + $0x1c8] sm:$0xff] %v968
      %977 = vst [vmem:[#allocation4 + $0x1e0] sm:$0xff] %v969
      %978 = vst [vmem:[#allocation4 + $0x1e8] sm:$0xff] %v970
      %v979 = vld [vmem:[#allocation3] sm:$0xff]
      %v980 = vld [vmem:[#allocation3 + $0x8] sm:$0xff]
      %v981 = vld [vmem:[#allocation3 + $0x10] sm:$0xff]
      %v982 = vld [vmem:[#allocation3 + $0x30] sm:$0xff]
      %v983 = vld [vmem:[#allocation3 + $0x38] sm:$0xff]
      %v984 = vld [vmem:[#allocation3 + $0x40] sm:$0xff]
      %985 = vrot.lane.b32.xlu0 %v699, 34
      %v986 = vpop.permute.xlu0 %985
      %987 = vrot.lane.b32.xlu0 %v703, 34
      %v988 = vpop.permute.xlu0 %987
      %vm989 = vcmask 277504
      %v990 = vsel %vm989, %v986, %v988
      %v994 = vmul.f32 %v979, %v986
      %v995 = vmul.f32 %v980, %v990
      %v996 = vmul.f32 %v981, %v988
      %v997 = vmul.f32 %v982, %v986
      %v998 = vmul.f32 %v983, %v990
      %v999 = vmul.f32 %v984, %v988
      %1006 = vrot.lane.b32.xlu0 %v994, 94
      %v1007 = vpop.permute.xlu0 %1006
      %1008 = vrot.lane.b32.xlu0 %v995, 94
      %v1009 = vpop.permute.xlu0 %1008
      %1010 = vrot.lane.b32.xlu0 %v996, 94
      %v1011 = vpop.permute.xlu0 %1010
      %1012 = vrot.lane.b32.xlu0 %v997, 94
      %v1013 = vpop.permute.xlu0 %1012
      %1014 = vrot.lane.b32.xlu0 %v998, 94
      %v1015 = vpop.permute.xlu0 %1014
      %1016 = vrot.lane.b32.xlu0 %v999, 94
      %v1017 = vpop.permute.xlu0 %1016
      %vm1018 = vcmask 769024
      %v1019 = vsel %vm1018, %v1007, %v1009
      %v1020 = vsel %vm1018, %v1009, %v1011
      %v1021 = vsel %vm1018, %v1013, %v1015
      %v1022 = vsel %vm1018, %v1015, %v1017
      %1027 = vst [vmem:[#allocation4 + $0x200] sm:$0xff] %v1019
      %1028 = vst [vmem:[#allocation4 + $0x208] sm:$0xff] %v1020
      %1029 = vst [vmem:[#allocation4 + $0x220] sm:$0xff] %v1021
      %1030 = vst [vmem:[#allocation4 + $0x228] sm:$0xff] %v1022
      %v1031 = vld [vmem:[#allocation3 + $0x18] sm:$0xff]
      %v1032 = vld [vmem:[#allocation3 + $0x20] sm:$0xff]
      %v1033 = vld [vmem:[#allocation3 + $0x48] sm:$0xff]
      %v1034 = vld [vmem:[#allocation3 + $0x50] sm:$0xff]
      %v1035 = vmul.f32 %v1031, %v637
      %v1036 = vmul.f32 %v1032, %v641
      %v1037 = vmul.f32 %v1033, %v637
      %v1038 = vmul.f32 %v1034, %v641
      %1039 = vst [vmem:[#allocation4 + $0x10] sm:$0xff] %v1035
      %1040 = vst [vmem:[#allocation4 + $0x18] sm:$0xff] %v1036
      %1041 = vst [vmem:[#allocation4 + $0x30] sm:$0xff] %v1037
      %1042 = vst [vmem:[#allocation4 + $0x38] sm:$0xff] %v1038
      %v1043 = vld [vmem:[#allocation3 + $0x18] sm:$0xff]
      %v1044 = vld [vmem:[#allocation3 + $0x20] sm:$0xff]
      %v1045 = vld [vmem:[#allocation3 + $0x28] sm:$0xff]
      %v1046 = vld [vmem:[#allocation3 + $0x48] sm:$0xff]
      %v1047 = vld [vmem:[#allocation3 + $0x50] sm:$0xff]
      %v1048 = vld [vmem:[#allocation3 + $0x58] sm:$0xff]
      %1055 = vrot.lane.b32.xlu0 %v1043, 127
      %v1056 = vpop.permute.xlu0 %1055
      %1057 = vrot.lane.b32.xlu0 %v1044, 127
      %v1058 = vpop.permute.xlu0 %1057
      %1059 = vrot.lane.b32.xlu0 %v1045, 127
      %v1060 = vpop.permute.xlu0 %1059
      %1061 = vrot.lane.b32.xlu0 %v1046, 127
      %v1062 = vpop.permute.xlu0 %1061
      %1063 = vrot.lane.b32.xlu0 %v1047, 127
      %v1064 = vpop.permute.xlu0 %1063
      %1065 = vrot.lane.b32.xlu0 %v1048, 127
      %v1066 = vpop.permute.xlu0 %1065
      %v1067 = vsel %vm676, %v1056, %v1058
      %v1068 = vsel %vm676, %v1058, %v1060
      %v1069 = vsel %vm676, %v1062, %v1064
      %v1070 = vsel %vm676, %v1064, %v1066
      %1075 = vst [vmem:[#allocation4 + $0x50] sm:$0xff] %v1067
      %1076 = vst [vmem:[#allocation4 + $0x58] sm:$0xff] %v1068
      %1077 = vst [vmem:[#allocation4 + $0x70] sm:$0xff] %v1069
      %1078 = vst [vmem:[#allocation4 + $0x78] sm:$0xff] %v1070
      %v1079 = vld [vmem:[#allocation3 + $0x18] sm:$0xff]
      %v1080 = vld [vmem:[#allocation3 + $0x20] sm:$0xff]
      %v1081 = vld [vmem:[#allocation3 + $0x28] sm:$0xff]
      %v1082 = vld [vmem:[#allocation3 + $0x48] sm:$0xff]
      %v1083 = vld [vmem:[#allocation3 + $0x50] sm:$0xff]
      %v1084 = vld [vmem:[#allocation3 + $0x58] sm:$0xff]
      %v1085 = vmul.f32 %v1079, %v705
      %v1086 = vmul.f32 %v1080, %v709
      %v1087 = vmul.f32 %v1081, %v707
      %v1088 = vmul.f32 %v1082, %v705
      %v1089 = vmul.f32 %v1083, %v709
      %v1090 = vmul.f32 %v1084, %v707
      %1097 = vrot.lane.b32.xlu0 %v1085, 126
      %v1098 = vpop.permute.xlu0 %1097
      %1099 = vrot.lane.b32.xlu0 %v1086, 126
      %v1100 = vpop.permute.xlu0 %1099
      %1101 = vrot.lane.b32.xlu0 %v1087, 126
      %v1102 = vpop.permute.xlu0 %1101
      %1103 = vrot.lane.b32.xlu0 %v1088, 126
      %v1104 = vpop.permute.xlu0 %1103
      %1105 = vrot.lane.b32.xlu0 %v1089, 126
      %v1106 = vpop.permute.xlu0 %1105
      %1107 = vrot.lane.b32.xlu0 %v1090, 126
      %v1108 = vpop.permute.xlu0 %1107
      %v1109 = vsel %vm737, %v1098, %v1100
      %v1110 = vsel %vm737, %v1100, %v1102
      %v1111 = vsel %vm737, %v1104, %v1106
      %v1112 = vsel %vm737, %v1106, %v1108
      %1117 = vst [vmem:[#allocation4 + $0x90] sm:$0xff] %v1109
      %1118 = vst [vmem:[#allocation4 + $0x98] sm:$0xff] %v1110
      %1119 = vst [vmem:[#allocation4 + $0xb0] sm:$0xff] %v1111
      %1120 = vst [vmem:[#allocation4 + $0xb8] sm:$0xff] %v1112
      %v1121 = vld [vmem:[#allocation3 + $0x18] sm:$0xff]
      %v1122 = vld [vmem:[#allocation3 + $0x20] sm:$0xff]
      %v1123 = vld [vmem:[#allocation3 + $0x28] sm:$0xff]
      %v1124 = vld [vmem:[#allocation3 + $0x48] sm:$0xff]
      %v1125 = vld [vmem:[#allocation3 + $0x50] sm:$0xff]
      %v1126 = vld [vmem:[#allocation3 + $0x58] sm:$0xff]
      %v1127 = vmul.f32 %v1121, %v757
      %v1128 = vmul.f32 %v1122, %v760
      %v1129 = vmul.f32 %v1123, %v759
      %v1130 = vmul.f32 %v1124, %v757
      %v1131 = vmul.f32 %v1125, %v760
      %v1132 = vmul.f32 %v1126, %v759
      %1139 = vrot.lane.b32.xlu0 %v1127, 112
      %v1140 = vpop.permute.xlu0 %1139
      %1141 = vrot.lane.b32.xlu0 %v1128, 112
      %v1142 = vpop.permute.xlu0 %1141
      %1143 = vrot.lane.b32.xlu0 %v1129, 112
      %v1144 = vpop.permute.xlu0 %1143
      %1145 = vrot.lane.b32.xlu0 %v1130, 112
      %v1146 = vpop.permute.xlu0 %1145
      %1147 = vrot.lane.b32.xlu0 %v1131, 112
      %v1148 = vpop.permute.xlu0 %1147
      %1149 = vrot.lane.b32.xlu0 %v1132, 112
      %v1150 = vpop.permute.xlu0 %1149
      %v1151 = vsel %vm788, %v1140, %v1142
      %v1152 = vsel %vm788, %v1142, %v1144
      %v1153 = vsel %vm788, %v1146, %v1148
      %v1154 = vsel %vm788, %v1148, %v1150
      %1159 = vst [vmem:[#allocation4 + $0xd0] sm:$0xff] %v1151
      %1160 = vst [vmem:[#allocation4 + $0xd8] sm:$0xff] %v1152
      %1161 = vst [vmem:[#allocation4 + $0xf0] sm:$0xff] %v1153
      %1162 = vst [vmem:[#allocation4 + $0xf8] sm:$0xff] %v1154
      %v1163 = vld [vmem:[#allocation3 + $0x18] sm:$0xff]
      %v1164 = vld [vmem:[#allocation3 + $0x20] sm:$0xff]
      %v1165 = vld [vmem:[#allocation3 + $0x28] sm:$0xff]
      %v1166 = vld [vmem:[#allocation3 + $0x48] sm:$0xff]
      %v1167 = vld [vmem:[#allocation3 + $0x50] sm:$0xff]
      %v1168 = vld [vmem:[#allocation3 + $0x58] sm:$0xff]
      %1175 = vrot.lane.b32.xlu0 %v1163, 111
      %v1176 = vpop.permute.xlu0 %1175
      %1177 = vrot.lane.b32.xlu0 %v1164, 111
      %v1178 = vpop.permute.xlu0 %1177
      %1179 = vrot.lane.b32.xlu0 %v1165, 111
      %v1180 = vpop.permute.xlu0 %1179
      %1181 = vrot.lane.b32.xlu0 %v1166, 111
      %v1182 = vpop.permute.xlu0 %1181
      %1183 = vrot.lane.b32.xlu0 %v1167, 111
      %v1184 = vpop.permute.xlu0 %1183
      %1185 = vrot.lane.b32.xlu0 %v1168, 111
      %v1186 = vpop.permute.xlu0 %1185
      %v1187 = vsel %vm825, %v1176, %v1178
      %v1188 = vsel %vm825, %v1178, %v1180
      %v1189 = vsel %vm825, %v1182, %v1184
      %v1190 = vsel %vm825, %v1184, %v1186
      %1195 = vst [vmem:[#allocation4 + $0x110] sm:$0xff] %v1187
      %1196 = vst [vmem:[#allocation4 + $0x118] sm:$0xff] %v1188
      %1197 = vst [vmem:[#allocation4 + $0x130] sm:$0xff] %v1189
      %1198 = vst [vmem:[#allocation4 + $0x138] sm:$0xff] %v1190
      %v1199 = vld [vmem:[#allocation3 + $0x18] sm:$0xff]
      %v1200 = vld [vmem:[#allocation3 + $0x20] sm:$0xff]
      %v1201 = vld [vmem:[#allocation3 + $0x28] sm:$0xff]
      %v1202 = vld [vmem:[#allocation3 + $0x48] sm:$0xff]
      %v1203 = vld [vmem:[#allocation3 + $0x50] sm:$0xff]
      %v1204 = vld [vmem:[#allocation3 + $0x58] sm:$0xff]
      %v1205 = vmul.f32 %v1199, %v845
      %v1206 = vmul.f32 %v1200, %v849
      %v1207 = vmul.f32 %v1201, %v847
      %v1208 = vmul.f32 %v1202, %v845
      %v1209 = vmul.f32 %v1203, %v849
      %v1210 = vmul.f32 %v1204, %v847
      %1217 = vrot.lane.b32.xlu0 %v1205, 110
      %v1218 = vpop.permute.xlu0 %1217
      %1219 = vrot.lane.b32.xlu0 %v1206, 110
      %v1220 = vpop.permute.xlu0 %1219
      %1221 = vrot.lane.b32.xlu0 %v1207, 110
      %v1222 = vpop.permute.xlu0 %1221
      %1223 = vrot.lane.b32.xlu0 %v1208, 110
      %v1224 = vpop.permute.xlu0 %1223
      %1225 = vrot.lane.b32.xlu0 %v1209, 110
      %v1226 = vpop.permute.xlu0 %1225
      %1227 = vrot.lane.b32.xlu0 %v1210, 110
      %v1228 = vpop.permute.xlu0 %1227
      %v1229 = vsel %vm877, %v1218, %v1220
      %v1230 = vsel %vm877, %v1220, %v1222
      %v1231 = vsel %vm877, %v1224, %v1226
      %v1232 = vsel %vm877, %v1226, %v1228
      %1237 = vst [vmem:[#allocation4 + $0x150] sm:$0xff] %v1229
      %1238 = vst [vmem:[#allocation4 + $0x158] sm:$0xff] %v1230
      %1239 = vst [vmem:[#allocation4 + $0x170] sm:$0xff] %v1231
      %1240 = vst [vmem:[#allocation4 + $0x178] sm:$0xff] %v1232
      %v1241 = vld [vmem:[#allocation3 + $0x18] sm:$0xff]
      %v1242 = vld [vmem:[#allocation3 + $0x20] sm:$0xff]
      %v1243 = vld [vmem:[#allocation3 + $0x28] sm:$0xff]
      %v1244 = vld [vmem:[#allocation3 + $0x48] sm:$0xff]
      %v1245 = vld [vmem:[#allocation3 + $0x50] sm:$0xff]
      %v1246 = vld [vmem:[#allocation3 + $0x58] sm:$0xff]
      %v1247 = vmul.f32 %v1241, %v897
      %v1248 = vmul.f32 %v1242, %v901
      %v1249 = vmul.f32 %v1243, %v899
      %v1250 = vmul.f32 %v1244, %v897
      %v1251 = vmul.f32 %v1245, %v901
      %v1252 = vmul.f32 %v1246, %v899
      %1259 = vrot.lane.b32.xlu0 %v1247, 96
      %v1260 = vpop.permute.xlu0 %1259
      %1261 = vrot.lane.b32.xlu0 %v1248, 96
      %v1262 = vpop.permute.xlu0 %1261
      %1263 = vrot.lane.b32.xlu0 %v1249, 96
      %v1264 = vpop.permute.xlu0 %1263
      %1265 = vrot.lane.b32.xlu0 %v1250, 96
      %v1266 = vpop.permute.xlu0 %1265
      %1267 = vrot.lane.b32.xlu0 %v1251, 96
      %v1268 = vpop.permute.xlu0 %1267
      %1269 = vrot.lane.b32.xlu0 %v1252, 96
      %v1270 = vpop.permute.xlu0 %1269
      %v1271 = vsel %vm929, %v1260, %v1262
      %v1272 = vsel %vm929, %v1262, %v1264
      %v1273 = vsel %vm929, %v1266, %v1268
      %v1274 = vsel %vm929, %v1268, %v1270
      %1279 = vst [vmem:[#allocation4 + $0x190] sm:$0xff] %v1271
      %1280 = vst [vmem:[#allocation4 + $0x198] sm:$0xff] %v1272
      %1281 = vst [vmem:[#allocation4 + $0x1b0] sm:$0xff] %v1273
      %1282 = vst [vmem:[#allocation4 + $0x1b8] sm:$0xff] %v1274
      %v1283 = vld [vmem:[#allocation3 + $0x18] sm:$0xff]
      %v1284 = vld [vmem:[#allocation3 + $0x20] sm:$0xff]
      %v1285 = vld [vmem:[#allocation3 + $0x28] sm:$0xff]
      %v1286 = vld [vmem:[#allocation3 + $0x48] sm:$0xff]
      %v1287 = vld [vmem:[#allocation3 + $0x50] sm:$0xff]
      %v1288 = vld [vmem:[#allocation3 + $0x58] sm:$0xff]
      %1295 = vrot.lane.b32.xlu0 %v1283, 95
      %v1296 = vpop.permute.xlu0 %1295
      %1297 = vrot.lane.b32.xlu0 %v1284, 95
      %v1298 = vpop.permute.xlu0 %1297
      %1299 = vrot.lane.b32.xlu0 %v1285, 95
      %v1300 = vpop.permute.xlu0 %1299
      %1301 = vrot.lane.b32.xlu0 %v1286, 95
      %v1302 = vpop.permute.xlu0 %1301
      %1303 = vrot.lane.b32.xlu0 %v1287, 95
      %v1304 = vpop.permute.xlu0 %1303
      %1305 = vrot.lane.b32.xlu0 %v1288, 95
      %v1306 = vpop.permute.xlu0 %1305
      %v1307 = vsel %vm966, %v1296, %v1298
      %v1308 = vsel %vm966, %v1298, %v1300
      %v1309 = vsel %vm966, %v1302, %v1304
      %v1310 = vsel %vm966, %v1304, %v1306
      %1315 = vst [vmem:[#allocation4 + $0x1d0] sm:$0xff] %v1307
      %1316 = vst [vmem:[#allocation4 + $0x1d8] sm:$0xff] %v1308
      %1317 = vst [vmem:[#allocation4 + $0x1f0] sm:$0xff] %v1309
      %1318 = vst [vmem:[#allocation4 + $0x1f8] sm:$0xff] %v1310
      %v1319 = vld [vmem:[#allocation3 + $0x18] sm:$0xff]
      %v1320 = vld [vmem:[#allocation3 + $0x20] sm:$0xff]
      %v1321 = vld [vmem:[#allocation3 + $0x28] sm:$0xff]
      %v1322 = vld [vmem:[#allocation3 + $0x48] sm:$0xff]
      %v1323 = vld [vmem:[#allocation3 + $0x50] sm:$0xff]
      %v1324 = vld [vmem:[#allocation3 + $0x58] sm:$0xff]
      %v1325 = vmul.f32 %v1319, %v986
      %v1326 = vmul.f32 %v1320, %v990
      %v1327 = vmul.f32 %v1321, %v988
      %v1328 = vmul.f32 %v1322, %v986
      %v1329 = vmul.f32 %v1323, %v990
      %v1330 = vmul.f32 %v1324, %v988
      %1337 = vrot.lane.b32.xlu0 %v1325, 94
      %v1338 = vpop.permute.xlu0 %1337
      %1339 = vrot.lane.b32.xlu0 %v1326, 94
      %v1340 = vpop.permute.xlu0 %1339
      %1341 = vrot.lane.b32.xlu0 %v1327, 94
      %v1342 = vpop.permute.xlu0 %1341
      %1343 = vrot.lane.b32.xlu0 %v1328, 94
      %v1344 = vpop.permute.xlu0 %1343
      %1345 = vrot.lane.b32.xlu0 %v1329, 94
      %v1346 = vpop.permute.xlu0 %1345
      %1347 = vrot.lane.b32.xlu0 %v1330, 94
      %v1348 = vpop.permute.xlu0 %1347
      %v1349 = vsel %vm1018, %v1338, %v1340
      %v1350 = vsel %vm1018, %v1340, %v1342
      %v1351 = vsel %vm1018, %v1344, %v1346
      %v1352 = vsel %vm1018, %v1346, %v1348
      %1357 = vst [vmem:[#allocation4 + $0x210] sm:$0xff] %v1349
      %1358 = vst [vmem:[#allocation4 + $0x218] sm:$0xff] %v1350
      %1359 = vst [vmem:[#allocation4 + $0x230] sm:$0xff] %v1351
      %1360 = vst [vmem:[#allocation4 + $0x238] sm:$0xff] %v1352
      %v1361 = vld [vmem:[%s4] sm:$0xff]
      %v1362 = vld [vmem:[%s4 + $0x8] sm:$0xff]
      %v1363 = vld [vmem:[%s4 + $0x10] sm:$0xff]
      %v1364 = vld [vmem:[%s4 + $0x18] sm:$0xff]
      %v1365 = vld [vmem:[#allocation4] sm:$0xff]
      %v1366 = vld [vmem:[#allocation4 + $0x8] sm:$0xff]
      %v1367 = vld [vmem:[#allocation4 + $0x10] sm:$0xff]
      %v1368 = vld [vmem:[#allocation4 + $0x18] sm:$0xff]
      %v1369 = vld [vmem:[#allocation4 + $0x20] sm:$0xff]
      %v1370 = vld [vmem:[#allocation4 + $0x28] sm:$0xff]
      %v1371 = vld [vmem:[#allocation4 + $0x30] sm:$0xff]
      %v1372 = vld [vmem:[#allocation4 + $0x38] sm:$0xff]
      %v1373 = vld [vmem:[#allocation4 + $0x40] sm:$0xff]
      %v1374 = vld [vmem:[#allocation4 + $0x48] sm:$0xff]
      %v1375 = vld [vmem:[#allocation4 + $0x50] sm:$0xff]
      %v1376 = vld [vmem:[#allocation4 + $0x58] sm:$0xff]
      %v1377 = vld [vmem:[#allocation4 + $0x60] sm:$0xff]
      %v1378 = vld [vmem:[#allocation4 + $0x68] sm:$0xff]
      %v1379 = vld [vmem:[#allocation4 + $0x70] sm:$0xff]
      %v1380 = vld [vmem:[#allocation4 + $0x78] sm:$0xff]
      %v1381 = vld [vmem:[#allocation4 + $0x80] sm:$0xff]
      %v1382 = vld [vmem:[#allocation4 + $0x88] sm:$0xff]
      %v1383 = vld [vmem:[#allocation4 + $0x90] sm:$0xff]
      %v1384 = vld [vmem:[#allocation4 + $0x98] sm:$0xff]
      %v1385 = vld [vmem:[#allocation4 + $0xa0] sm:$0xff]
      %v1386 = vld [vmem:[#allocation4 + $0xa8] sm:$0xff]
      %v1387 = vld [vmem:[#allocation4 + $0xb0] sm:$0xff]
      %v1388 = vld [vmem:[#allocation4 + $0xb8] sm:$0xff]
      %v1389 = vld [vmem:[#allocation4 + $0xc0] sm:$0xff]
      %v1390 = vld [vmem:[#allocation4 + $0xc8] sm:$0xff]
      %v1391 = vld [vmem:[#allocation4 + $0xd0] sm:$0xff]
      %v1392 = vld [vmem:[#allocation4 + $0xd8] sm:$0xff]
      %v1393 = vld [vmem:[#allocation4 + $0xe0] sm:$0xff]
      %v1394 = vld [vmem:[#allocation4 + $0xe8] sm:$0xff]
      %v1395 = vld [vmem:[#allocation4 + $0xf0] sm:$0xff]
      %v1396 = vld [vmem:[#allocation4 + $0xf8] sm:$0xff]
      %v1397 = vld [vmem:[#allocation4 + $0x100] sm:$0xff]
      %v1398 = vld [vmem:[#allocation4 + $0x108] sm:$0xff]
      %v1399 = vld [vmem:[#allocation4 + $0x110] sm:$0xff]
      %v1400 = vld [vmem:[#allocation4 + $0x118] sm:$0xff]
      %v1401 = vld [vmem:[#allocation4 + $0x120] sm:$0xff]
      %v1402 = vld [vmem:[#allocation4 + $0x128] sm:$0xff]
      %v1403 = vld [vmem:[#allocation4 + $0x130] sm:$0xff]
      %v1404 = vld [vmem:[#allocation4 + $0x138] sm:$0xff]
      %v1405 = vld [vmem:[#allocation4 + $0x140] sm:$0xff]
      %v1406 = vld [vmem:[#allocation4 + $0x148] sm:$0xff]
      %v1407 = vld [vmem:[#allocation4 + $0x150] sm:$0xff]
      %v1408 = vld [vmem:[#allocation4 + $0x158] sm:$0xff]
      %v1409 = vld [vmem:[#allocation4 + $0x160] sm:$0xff]
      %v1410 = vld [vmem:[#allocation4 + $0x168] sm:$0xff]
      %v1411 = vld [vmem:[#allocation4 + $0x170] sm:$0xff]
      %v1412 = vld [vmem:[#allocation4 + $0x178] sm:$0xff]
      %v1413 = vld [vmem:[#allocation4 + $0x180] sm:$0xff]
      %v1414 = vld [vmem:[#allocation4 + $0x188] sm:$0xff]
      %v1415 = vld [vmem:[#allocation4 + $0x190] sm:$0xff]
      %v1416 = vld [vmem:[#allocation4 + $0x198] sm:$0xff]
      %v1417 = vld [vmem:[#allocation4 + $0x1a0] sm:$0xff]
      %v1418 = vld [vmem:[#allocation4 + $0x1a8] sm:$0xff]
      %v1419 = vld [vmem:[#allocation4 + $0x1b0] sm:$0xff]
      %v1420 = vld [vmem:[#allocation4 + $0x1b8] sm:$0xff]
      %v1421 = vld [vmem:[#allocation4 + $0x1c0] sm:$0xff]
      %v1422 = vld [vmem:[#allocation4 + $0x1c8] sm:$0xff]
      %v1423 = vld [vmem:[#allocation4 + $0x1d0] sm:$0xff]
      %v1424 = vld [vmem:[#allocation4 + $0x1d8] sm:$0xff]
      %v1425 = vld [vmem:[#allocation4 + $0x1e0] sm:$0xff]
      %v1426 = vld [vmem:[#allocation4 + $0x1e8] sm:$0xff]
      %v1427 = vld [vmem:[#allocation4 + $0x1f0] sm:$0xff]
      %v1428 = vld [vmem:[#allocation4 + $0x1f8] sm:$0xff]
      %v1429 = vld [vmem:[#allocation4 + $0x200] sm:$0xff]
      %v1430 = vld [vmem:[#allocation4 + $0x208] sm:$0xff]
      %v1431 = vld [vmem:[#allocation4 + $0x210] sm:$0xff]
      %v1432 = vld [vmem:[#allocation4 + $0x218] sm:$0xff]
      %v1433 = vld [vmem:[#allocation4 + $0x220] sm:$0xff]
      %v1434 = vld [vmem:[#allocation4 + $0x228] sm:$0xff]
      %v1435 = vld [vmem:[#allocation4 + $0x230] sm:$0xff]
      %v1436 = vld [vmem:[#allocation4 + $0x238] sm:$0xff]
      %v1437 = vld [vmem:[%s5] sm:$0xff]
      %v1438 = vld [vmem:[%s5 + $0x8] sm:$0xff]
      %1440 = vset.pattern.permute.xlu0 0
      %1441 = vperm.xlu0 %1440, %v1437
      %v1442 = vpop.permute.xlu0 %1441
      %1445 = vset.pattern.permute.xlu0 0
      %1446 = vperm.xlu0 %1445, %v1438
      %v1447 = vpop.permute.xlu0 %1446
      %v1450 = vsel %vm379, %v1362, 0
      %v1453 = vsel %vm379, %v1364, 0
      %1455 = vmatprep.subr.mxu0 %v1366
      %1456 = vmatpush1.msra.mxu0 %v1365
      %1457 = vmatprep.subr.mxu0 %v1370
      %1458 = vmatpush1.msra.mxu0 %v1369
      %1459 = vmatprep.subr.mxu0 %v1374
      %1460 = vmatpush1.msra.mxu0 %v1373
      %1461 = vmatprep.subr.mxu0 %v1378
      %1462 = vmatpush1.msra.mxu0 %v1377
      %1463 = vmatprep.subr.mxu0 %v1382
      %1464 = vmatpush1.msra.mxu0 %v1381
      %1465 = vmatprep.subr.mxu0 %v1386
      %1466 = vmatpush1.msra.mxu0 %v1385
      %1467 = vmatprep.subr.mxu0 %v1390
      %1468 = vmatpush1.msra.mxu0 %v1389
      %1469 = vmatprep.subr.mxu0 %v1394
      %1470 = vmatpush1.msra.mxu0 %v1393
      %1471 = vmatprep.subr.mxu0 %v1398
      %1472 = vmatpush1.msra.mxu0 %v1397
      %1473 = vmatprep.subr.mxu0 %v1402
      %1474 = vmatpush1.msra.mxu0 %v1401
      %1475 = vmatprep.subr.mxu0 %v1406
      %1476 = vmatpush1.msra.mxu0 %v1405
      %1477 = vmatprep.subr.mxu0 %v1410
      %1478 = vmatpush1.msra.mxu0 %v1409
      %1479 = vmatprep.subr.mxu0 %v1414
      %1480 = vmatpush1.msra.mxu0 %v1413
      %1481 = vmatprep.subr.mxu0 %v1418
      %1482 = vmatpush1.msra.mxu0 %v1417
      %1483 = vmatprep.subr.mxu0 %v1422
      %1484 = vmatpush1.msra.mxu0 %v1421
      %1485 = vmatprep.subr.mxu0 %v1426
      %1486 = vmatpush1.msra.mxu0 %v1425
      %1487 = vmatprep.subr.mxu0 %v1430
      %1488 = vmatpush1.msra.mxu0 %v1429
      %1489 = vmatprep.subr.mxu0 %v1434
      %1490 = vmatpush1.msra.mxu0 %v1433
      %1491 = vmatprep.subr.mxu0 0.0
      %1492 = vmatpush1.msra.mxu0 0.0
      %1493 = vmatprep.subr.mxu0 0.0
      %1494 = vmatpush1.msra.mxu0 0.0
      %1495 = vmatprep.subr.mxu0 0.0
      %1496 = vmatpush1.msra.mxu0 0.0
      %1497 = vmatprep.subr.mxu0 0.0
      %1498 = vmatpush1.msra.mxu0 0.0
      %1499 = vmatprep.subr.mxu0 0.0
      %1500 = vmatpush1.msra.mxu0 0.0
      %1501 = vmatprep.subr.mxu0 0.0
      %1502 = vmatpush1.msra.mxu0 0.0
      %1503 = vmatprep.subr.mxu0 0.0
      %1504 = vmatpush1.msra.mxu0 0.0
      %1505 = vmatprep.subr.mxu0 0.0
      %1506 = vmatpush1.msra.mxu0 0.0
      %1507 = vmatprep.subr.mxu0 0.0
      %1508 = vmatpush1.msra.mxu0 0.0
      %1509 = vmatprep.subr.mxu0 0.0
      %1510 = vmatpush1.msra.mxu0 0.0
      %1511 = vmatprep.subr.mxu0 0.0
      %1512 = vmatpush1.msra.mxu0 0.0
      %1513 = vmatprep.subr.mxu0 0.0
      %1514 = vmatpush1.msra.mxu0 0.0
      %1515 = vmatprep.subr.mxu0 0.0
      %1516 = vmatpush1.msra.mxu0 0.0
      %1517 = vmatprep.subr.mxu0 0.0
      %1518 = vmatpush1.msra.mxu0 0.0
      %1519 = vmatprep.mubr.f32.mxu0 %v1450
      %1520 = vmatmul.mubr.f32.gmra.mrb[0].mxu0 %v1361
      %v1521 = vpop.f32.mrb[0].mxu0
      %v1522 = vadd.f32 %v1442, %v1521
      %v1523 = vpop.f32.mrb[0].mxu0
      %v1524 = vadd.f32 %v1442, %v1523
      %1525 = vmatprep.mubr.f32.mxu0 %v1453
      %1526 = vmatmul.mubr.f32.gmra.mrb[0].mxu0 %v1363
      %v1527 = vpop.f32.mrb[0].mxu0
      %v1528 = vadd.f32 %v1447, %v1527
      %v1529 = vpop.f32.mrb[0].mxu0
      %v1530 = vadd.f32 %v1447, %v1529
      %1531 = vdwg.mxu0
      %1532 = vmatprep.subr.mxu0 %v1368
      %1533 = vmatpush1.msra.mxu0 %v1367
      %1534 = vmatprep.subr.mxu0 %v1372
      %1535 = vmatpush1.msra.mxu0 %v1371
      %1536 = vmatprep.subr.mxu0 %v1376
      %1537 = vmatpush1.msra.mxu0 %v1375
      %1538 = vmatprep.subr.mxu0 %v1380
      %1539 = vmatpush1.msra.mxu0 %v1379
      %1540 = vmatprep.subr.mxu0 %v1384
      %1541 = vmatpush1.msra.mxu0 %v1383
      %1542 = vmatprep.subr.mxu0 %v1388
      %1543 = vmatpush1.msra.mxu0 %v1387
      %1544 = vmatprep.subr.mxu0 %v1392
      %1545 = vmatpush1.msra.mxu0 %v1391
      %1546 = vmatprep.subr.mxu0 %v1396
      %1547 = vmatpush1.msra.mxu0 %v1395
      %1548 = vmatprep.subr.mxu0 %v1400
      %1549 = vmatpush1.msra.mxu0 %v1399
      %1550 = vmatprep.subr.mxu0 %v1404
      %1551 = vmatpush1.msra.mxu0 %v1403
      %1552 = vmatprep.subr.mxu0 %v1408
      %1553 = vmatpush1.msra.mxu0 %v1407
      %1554 = vmatprep.subr.mxu0 %v1412
      %1555 = vmatpush1.msra.mxu0 %v1411
      %1556 = vmatprep.subr.mxu0 %v1416
      %1557 = vmatpush1.msra.mxu0 %v1415
      %1558 = vmatprep.subr.mxu0 %v1420
      %1559 = vmatpush1.msra.mxu0 %v1419
      %1560 = vmatprep.subr.mxu0 %v1424
      %1561 = vmatpush1.msra.mxu0 %v1423
      %1562 = vmatprep.subr.mxu0 %v1428
      %1563 = vmatpush1.msra.mxu0 %v1427
      %1564 = vmatprep.subr.mxu0 %v1432
      %1565 = vmatpush1.msra.mxu0 %v1431
      %1566 = vmatprep.subr.mxu0 %v1436
      %1567 = vmatpush1.msra.mxu0 %v1435
      %1568 = vmatprep.subr.mxu0 0.0
      %1569 = vmatpush1.msra.mxu0 0.0
      %1570 = vmatprep.subr.mxu0 0.0
      %1571 = vmatpush1.msra.mxu0 0.0
      %1572 = vmatprep.subr.mxu0 0.0
      %1573 = vmatpush1.msra.mxu0 0.0
      %1574 = vmatprep.subr.mxu0 0.0
      %1575 = vmatpush1.msra.mxu0 0.0
      %1576 = vmatprep.subr.mxu0 0.0
      %1577 = vmatpush1.msra.mxu0 0.0
      %1578 = vmatprep.subr.mxu0 0.0
      %1579 = vmatpush1.msra.mxu0 0.0
      %1580 = vmatprep.subr.mxu0 0.0
      %1581 = vmatpush1.msra.mxu0 0.0
      %1582 = vmatprep.subr.mxu0 0.0
      %1583 = vmatpush1.msra.mxu0 0.0
      %1584 = vmatprep.subr.mxu0 0.0
      %1585 = vmatpush1.msra.mxu0 0.0
      %1586 = vmatprep.subr.mxu0 0.0
      %1587 = vmatpush1.msra.mxu0 0.0
      %1588 = vmatprep.subr.mxu0 0.0
      %1589 = vmatpush1.msra.mxu0 0.0
      %1590 = vmatprep.subr.mxu0 0.0
      %1591 = vmatpush1.msra.mxu0 0.0
      %1592 = vmatprep.subr.mxu0 0.0
      %1593 = vmatpush1.msra.mxu0 0.0
      %1594 = vmatprep.subr.mxu0 0.0
      %1595 = vmatpush1.msra.mxu0 0.0
      %1596 = vmatprep.mubr.f32.mxu0 %v1450
      %1597 = vmatmul.mubr.f32.gmra.mrb[0].mxu0 %v1361
      %v1598 = vpop.f32.mrb[0].mxu0
      %v1599 = vadd.f32 %v1442, %v1598
      %v1600 = vpop.f32.mrb[0].mxu0
      %v1601 = vadd.f32 %v1442, %v1600
      %1602 = vmatprep.mubr.f32.mxu0 %v1453
      %1603 = vmatmul.mubr.f32.gmra.mrb[0].mxu0 %v1363
      %v1604 = vpop.f32.mrb[0].mxu0
      %v1605 = vadd.f32 %v1447, %v1604
      %v1606 = vpop.f32.mrb[0].mxu0
      %v1607 = vadd.f32 %v1447, %v1606
      %1608 = vdwg.mxu0
      %v1609 = vxor.u32 %v1522, 2147483648
      %v1610 = vxor.u32 %v1524, 2147483648
      %v1611 = vxor.u32 %v1599, 2147483648
      %v1612 = vxor.u32 %v1601, 2147483648
      %v1613 = vxor.u32 %v1528, 2147483648
      %v1614 = vxor.u32 %v1530, 2147483648
      %v1615 = vxor.u32 %v1605, 2147483648
      %v1616 = vxor.u32 %v1607, 2147483648
      %v1617 = vmul.f32 %v1609, 1.442695
      %v1618 = vpow.pop %v1617
      %v1619 = vmul.f32 %v1610, 1.442695
      %v1620 = vpow.pop %v1619
      %v1621 = vmul.f32 %v1611, 1.442695
      %v1622 = vpow.pop %v1621
      %v1623 = vmul.f32 %v1612, 1.442695
      %v1624 = vpow.pop %v1623
      %v1625 = vmul.f32 %v1613, 1.442695
      %v1626 = vpow.pop %v1625
      %v1627 = vmul.f32 %v1614, 1.442695
      %v1628 = vpow.pop %v1627
      %v1629 = vmul.f32 %v1615, 1.442695
      %v1630 = vpow.pop %v1629
      %v1631 = vmul.f32 %v1616, 1.442695
      %v1632 = vpow.pop %v1631
      %v1633 = vadd.f32 %v1618, 1.0
      %v1634 = vadd.f32 %v1620, 1.0
      %v1635 = vadd.f32 %v1622, 1.0
      %v1636 = vadd.f32 %v1624, 1.0
      %v1637 = vadd.f32 %v1626, 1.0
      %v1638 = vadd.f32 %v1628, 1.0
      %v1639 = vadd.f32 %v1630, 1.0
      %v1640 = vadd.f32 %v1632, 1.0
      %v1641 = vrcp.pop %v1633
      %v1642 = vmul.f32 1.0, %v1641
      %v1643 = vrcp.pop %v1634
      %v1644 = vmul.f32 1.0, %v1643
      %v1645 = vrcp.pop %v1635
      %v1646 = vmul.f32 1.0, %v1645
      %v1647 = vrcp.pop %v1636
      %v1648 = vmul.f32 1.0, %v1647
      %v1649 = vrcp.pop %v1637
      %v1650 = vmul.f32 1.0, %v1649
      %v1651 = vrcp.pop %v1638
      %v1652 = vmul.f32 1.0, %v1651
      %v1653 = vrcp.pop %v1639
      %v1654 = vmul.f32 1.0, %v1653
      %v1655 = vrcp.pop %v1640
      %v1656 = vmul.f32 1.0, %v1655
      %v1657 = vmul.f32 %v556, %v1642
      %v1658 = vmul.f32 %v557, %v1644
      %v1659 = vmul.f32 %v558, %v1646
      %v1660 = vmul.f32 %v559, %v1648
      %v1661 = vmul.f32 %v560, %v1650
      %v1662 = vmul.f32 %v561, %v1652
      %v1663 = vmul.f32 %v562, %v1654
      %v1664 = vmul.f32 %v563, %v1656
      %v1665 = vadd.f32 %v1657, %v1661
      %v1666 = vadd.f32 %v1658, %v1662
      %v1667 = vadd.f32 %v1659, %v1663
      %v1668 = vadd.f32 %v1660, %v1664
      %1669 = vst [vmem:[%s337] sm:$0xff] %v1665
      %1670 = vst [vmem:[%s337 + $0x8] sm:$0xff] %v1666
      %s1671 = scalar_lea.vmem %s337, 16
      %1672 = vst [vmem:[%s1671] sm:$0xff] %v1667
      %1673 = vst [vmem:[%s1671 + $0x8] sm:$0xff] %v1668
      %s1674 = smul.u32 2, %s19
      %p1675 = scmp.lt.s32.totalorder %s1674, 3
      %s1676 = scalar_select %p1675, %s1674, 3
      %s1677 = smul.addr %s1676, 2
      %s1678 = smul.addr %s1677, 8
      %s1679 = scalar_lea.vmem %s8, %s1678
      // Predicated region
      $region53: #{dmff_forward.1} parent=51 // pred_check
        %p1680 = pneg %p215
      $region54: #{dmff_forward.1} parent=51 // pred_check_branch
        %1682 = sbr.rel (%p1680) target = $region56
      $region55: #{dmff_forward.1} parent=51 // pred_region
        %s1683 = smul.u32 2, %s19
      $region56: #{dmff_forward.1} parent=51 // pred_fallthru
        _
    $region52: #{dmff_forward.1} parent=5 // pred_fallthru
      _
    %p1684 = scmp.le.s32.totalorder 2, %s14
    // Predicated region
    $region57: #{dmff_forward.1} parent=5 // pred_check
      %p1685 = pneg %p1684
    $region58: #{dmff_forward.1} parent=5 // pred_check_branch
      %1687 = sbr.rel (%p1685) target = $region60
    $region59: #{dmff_forward.1} parent=5 // pred_region
      %s1688 = ssub.s32 %s14, 2
      // Predicated region
      $region61: #{dmff_forward.1} parent=59 // pred_check
        %p1689 = pneg %p221
      $region62: #{dmff_forward.1} parent=59 // pred_check_branch
        %1691 = sbr.rel (%p1689) target = $region64
      $region63: #{dmff_forward.1} parent=59 // pred_region
        %s1692 = smul.u32 2, %s20
        %p1693 = scmp.lt.s32.totalorder %s1692, 3
        %s1694 = scalar_select %p1693, %s1692, 3
        %s1695 = smul.addr %s1694, 2
        %s1696 = smul.addr %s1695, 8
        %s1697 = scalar_lea.vmem %s8, %s1696
      $region64: #{dmff_forward.1} parent=59 // pred_fallthru
        _
    $region60: #{dmff_forward.1} parent=5 // pred_fallthru
      _
  $region6: #{dmff_forward.1} parent=0 // loop_footer
    %s18 = sadd.s32 1, %s14
  $region7: #{dmff_forward.1} parent=0 // loop_footer_branch
    %13 = sbr.rel target = $region3
  $region8: #{dmff_forward.1} parent=0 // loop_exit
    _

</llo_original>
